<compile_context>
chip_gen: v7x
topology: tpu7x:2x2x1
jax: 0.10.0
libtpu: 0.0.40
codegen_flags: <defaults>
</compile_context>

<pallas_src>
import functools

import jax
import jax.numpy as jnp
from jax.experimental import pallas as pl
from jax.experimental.pallas import tpu as pltpu

LANE = 128
NEG_BIG = -1e30


# -----------------------------------------------------------------------------
# Kernel: BT graph pairs per grid step, fully fused (layers + pool + head)
# -----------------------------------------------------------------------------
def fused_gcn_kernel(xw_ref, a_ref, mask_ref,
                     b0_ref, wbd_ref, bbd_ref, wf_ref, bf_ref,
                     out_ref, *, layers, bt, n_nodes, dp):
    """Row layout  : [branch-1 graphs (BT*N rows) | branch-2 graphs (BT*N rows)]
       Lane layout : [branch-1 features (Dp)      | branch-2 features (Dp)]
    """
    a = a_ref[0]                                              # (R, R) bf16

    # Layer 0 (node-embed and X@W0 hoisted to host): h = relu(A @ XW + b0)
    agg = jnp.dot(a, xw_ref[0], preferred_element_type=jnp.float32)
    h = jnp.maximum(agg + b0_ref[...], 0.0)                   # (R, 2Dp) f32

    # Remaining GCN layers (unrolled): h = relu(A @ (h @ W_blockdiag) + b)
    for l in range(layers - 1):
        hw = jnp.dot(h.astype(jnp.bfloat16), wbd_ref[l],
                     preferred_element_type=jnp.float32)
        agg = jnp.dot(a, hw.astype(jnp.bfloat16),
                      preferred_element_type=jnp.float32)
        h = jnp.maximum(agg + bbd_ref[l], 0.0)

    # dgl.max_nodes: per-graph max over valid nodes (mask addend 0 / -1e30).
    hm = h + mask_ref[0]                                      # (R,1) lane-broadcast
    pooled_all = jnp.max(hm.reshape(2 * bt, n_nodes, 2 * dp), axis=1)   # (2BT, 2Dp)

    # torch.cat((p1, p2), 1) is a lane-select in this layout: branch-1 pooled
    # features live in lanes [0:Dp], branch-2 in lanes [Dp:2Dp].
    lane = jax.lax.broadcasted_iota(jnp.int32, (bt, 2 * dp), 1)
    pooled = jnp.where(lane < dp, pooled_all[:bt], pooled_all[bt:])     # (BT, 2Dp)

    # Head: leaky_relu(pooled @ Wf + bf) -> softmax (single K=2*Dp matmul;
    # padded logit lanes carry a -1e30 bias so they drop out of the softmax).
    z = jnp.dot(pooled.astype(jnp.bfloat16), wf_ref[...],
                preferred_element_type=jnp.float32) + bf_ref[...]       # (BT, Cp)
    z = jnp.where(z > 0, z, 0.01 * z)                         # F.leaky_relu (0.01)
    z = z - jnp.max(z, axis=-1, keepdims=True)
    e = jnp.exp(z)
    out_ref[...] = (e / jnp.sum(e, axis=-1, keepdims=True)).astype(out_ref.dtype)


# -----------------------------------------------------------------------------
# Host-side data / weight preparation
# -----------------------------------------------------------------------------
def choose_bt(batch, n_nodes):
    """BT graph pairs per step: BT*N ~ 128 rows per branch, BT | batch, grid>=2."""
    target = max(1, LANE // max(n_nodes, 1))
    cap = max(1, min(batch // 2 if batch >= 2 else batch, target))
    for cand in range(cap, 0, -1):
        if batch % cand == 0:
            return cand
    return 1


def _pad_to(x, axis, target):
    pads = [(0, 0)] * x.ndim
    pads[axis] = (0, target - x.shape[axis])
    return jnp.pad(x, pads)


def prepare_inputs(x1, adj1, nl1, x2, adj2, nl2, params, bt, dp):
    """Assemble per-step blocks: lane/row-stacked XW, block-diag adjacency, mask."""
    B, N, Fin = x1.shape
    G, M = B // bt, bt * N

    def branch_xw(x, w_emb, b_emb, w_gcn0):
        # Exact node embedding + first feature transform on the host (f32).
        h = x.reshape(B * N, Fin) @ w_emb + b_emb              # (B*N, D)
        xw = h @ w_gcn0                                        # (B*N, D)
        return _pad_to(xw, 1, dp).reshape(G, M, dp)            # (G, M, Dp)

    xw1 = branch_xw(x1, params["w_emb1"], params["b_emb1"], params["w_gcn1"][0])
    xw2 = branch_xw(x2, params["w_emb2"], params["b_emb2"], params["w_gcn2"][0])
    z = jnp.zeros_like(xw1)
    xw_all = jnp.concatenate(
        [jnp.concatenate([xw1, z], axis=2),
         jnp.concatenate([z, xw2], axis=2)], axis=1).astype(jnp.bfloat16)  # (G, R, 2Dp)

    def branch_block_diag(a):
        a = a.reshape(G, bt, N, N)
        eye = jnp.eye(bt, dtype=a.dtype)
        bd = jnp.einsum('gbnm,bk->gbnkm', a, eye)              # block-diag over BT
        return bd.reshape(G, M, M)

    a1 = branch_block_diag(adj1)
    a2 = branch_block_diag(adj2)
    za = jnp.zeros((G, M, M), adj1.dtype)
    a_all = jnp.concatenate(
        [jnp.concatenate([a1, za], axis=2),
         jnp.concatenate([za, a2], axis=2)], axis=1).astype(jnp.bfloat16)  # (G, R, R)

    def branch_mask(nl):
        valid = jnp.arange(N)[None, :] < nl[:, None]           # (B, N)
        return jnp.where(valid, 0.0, NEG_BIG).astype(jnp.float32).reshape(G, M)

    mask_all = jnp.concatenate([branch_mask(nl1), branch_mask(nl2)], axis=1)
    mask_all = mask_all[:, :, None]                            # (G, R, 1)
    return xw_all, a_all, mask_all


def prepare_weights(params, dp, cp):
    """Block-diagonal [W1 0; 0 W2] per layer (bf16), lane-stacked biases (f32),
    head weight laid out for a single K=2*Dp contraction, -1e30 pad-lane bias."""
    L, D, _ = params["w_gcn1"].shape

    def pad2(w):
        return _pad_to(_pad_to(w, 0, dp), 1, dp)

    def padb(b):
        return _pad_to(b, 0, dp)

    if L > 1:
        wbd, bbd = [], []
        for l in range(1, L):
            w1, w2 = pad2(params["w_gcn1"][l]), pad2(params["w_gcn2"][l])
            zz = jnp.zeros_like(w1)
            wbd.append(jnp.concatenate([jnp.concatenate([w1, zz], 1),
                                        jnp.concatenate([zz, w2], 1)], 0))
            bbd.append(jnp.concatenate([padb(params["b_gcn1"][l]),
                                        padb(params["b_gcn2"][l])])[None, :])
        wbd = jnp.stack(wbd).astype(jnp.bfloat16)              # (L-1, 2Dp, 2Dp)
        bbd = jnp.stack(bbd)                                   # (L-1, 1, 2Dp) f32
    else:  # dummies, never read (loop runs L-1 = 0 times)
        wbd = jnp.zeros((1, 2 * dp, 2 * dp), jnp.bfloat16)
        bbd = jnp.zeros((1, 1, 2 * dp), jnp.float32)

    b0 = jnp.concatenate([padb(params["b_gcn1"][0]),
                          padb(params["b_gcn2"][0])])[None, :]  # (1, 2Dp) f32

    wf, C = params["w_f"], params["w_f"].shape[1]
    wf_full = jnp.zeros((2 * dp, cp), jnp.float32)
    wf_full = wf_full.at[:D, :C].set(wf[:D])
    wf_full = wf_full.at[dp:dp + D, :C].set(wf[D:])
    wf_full = wf_full.astype(jnp.bfloat16)                     # (2Dp, Cp)
    bf_full = jnp.full((1, cp), NEG_BIG, jnp.float32)
    bf_full = bf_full.at[:, :C].set(params["b_f"][0])          # (1, Cp)
    return b0, wbd, bbd, wf_full, bf_full


# -----------------------------------------------------------------------------
# Wrapper
# -----------------------------------------------------------------------------
def run_gcn_model(x1, adj1, node_len1, x2, adj2, node_len2, params):
    B, N, _ = x1.shape
    L, D, _ = params["w_gcn1"].shape
    C = params["w_f"].shape[1]
    Dp = ((D + LANE - 1) // LANE) * LANE
    Cp = ((C + LANE - 1) // LANE) * LANE
    assert N % 8 == 0, "pad node count to a multiple of 8 on the host"

    BT = choose_bt(B, N)
    G, M = B // BT, BT * N
    R = 2 * M
    Lr = max(L - 1, 1)

    xw_all, a_all, mask_all = prepare_inputs(
        x1, adj1, node_len1, x2, adj2, node_len2, params, BT, Dp)
    b0, wbd, bbd, wf_full, bf_full = prepare_weights(params, Dp, Cp)

    kernel = functools.partial(fused_gcn_kernel, layers=L, bt=BT, n_nodes=N, dp=Dp)

    bmap3 = lambda g: (g, 0, 0)     # per-step blocks
    cmap2 = lambda g: (0, 0)        # resident 2-D weights
    cmap3 = lambda g: (0, 0, 0)     # resident 3-D weights

    grid_spec = pltpu.PrefetchScalarGridSpec(
        num_scalar_prefetch=0,
        grid=(G,),
        in_specs=[
            pl.BlockSpec((1, R, 2 * Dp), bmap3),          # XW (lane/row stacked)
            pl.BlockSpec((1, R, R), bmap3),               # block-diag adjacency
            pl.BlockSpec((1, R, 1), bmap3),               # readout mask addend
            pl.BlockSpec((1, 2 * Dp), cmap2),             # layer-0 bias
            pl.BlockSpec((Lr, 2 * Dp, 2 * Dp), cmap3),    # block-diag GCN weights
            pl.BlockSpec((Lr, 1, 2 * Dp), cmap3),         # GCN biases
            pl.BlockSpec((2 * Dp, Cp), cmap2),            # head weight
            pl.BlockSpec((1, Cp), cmap2),                 # head bias (-1e30 pads)
        ],
        out_specs=pl.BlockSpec((BT, Cp), lambda g: (g, 0)),
    )
    out = pl.pallas_call(
        kernel,
        out_shape=jax.ShapeDtypeStruct((B, Cp), jnp.float32),
        grid_spec=grid_spec,
        compiler_params=pltpu.CompilerParams(
            dimension_semantics=("parallel",)),
    )(xw_all, a_all, mask_all, b0, wbd, bbd, wf_full, bf_full)
    return out[:, :C]


# -----------------------------------------------------------------------------
# Pure-JAX reference (unfused / unpadded / f32) for correctness checking
# -----------------------------------------------------------------------------
def gcn_forward_reference(x1, adj1, nl1, x2, adj2, nl2, params):
    def branch(x, a, nlen, w_emb, b_emb, w_gcn, b_gcn):
        h = x @ w_emb + b_emb
        for l in range(w_gcn.shape[0]):
            h = jax.nn.relu(a @ (h @ w_gcn[l]) + b_gcn[l])
        mask = jnp.arange(x.shape[1])[None, :, None] < nlen[:, None, None]
        return jnp.max(jnp.where(mask, h, NEG_BIG), axis=1)

    p1 = branch(x1, adj1, nl1, params["w_emb1"], params["b_emb1"],
                params["w_gcn1"], params["b_gcn1"])
    p2 = branch(x2, adj2, nl2, params["w_emb2"], params["b_emb2"],
                params["w_gcn2"], params["b_gcn2"])
    z = jnp.concatenate([p1, p2], axis=-1) @ params["w_f"] + params["b_f"]
    z = jnp.where(z > 0, z, 0.01 * z)
    return jax.nn.softmax(z, axis=-1)


# -----------------------------------------------------------------------------
# Deterministic setup
# -----------------------------------------------------------------------------
def build_normalized_adjacency(node_len, n_nodes):
    """Ring graph + self loops over the first node_len[b] nodes, row-normalized.
    Padding rows/cols are zeroed so real nodes never aggregate padding."""
    eye = jnp.eye(n_nodes, dtype=jnp.float32)
    ring = jnp.roll(eye, 1, axis=1) + jnp.roll(eye, -1, axis=1)
    a = (ring + eye)[None]                                          # (1, N, N)
    ids = jnp.arange(n_nodes)
    valid = (ids[None, :] < node_len[:, None]).astype(jnp.float32)  # (B, N)
    a = a * valid[:, :, None] * valid[:, None, :]
    deg = jnp.maximum(jnp.sum(a, axis=-1, keepdims=True), 1.0)
    return a / deg


def init_params(key, feat_dim, in_dim, out_dim, layers, class_num):
    ks = jax.random.split(key, 10)
    s = 0.1
    assert in_dim == out_dim, "GCN layers are stacked out_dim -> out_dim"
    return {
        "w_emb1": s * jax.random.normal(ks[0], (feat_dim, in_dim), jnp.float32),
        "b_emb1": s * jax.random.normal(ks[1], (1, in_dim), jnp.float32),
        "w_emb2": s * jax.random.normal(ks[2], (feat_dim, in_dim), jnp.float32),
        "b_emb2": s * jax.random.normal(ks[3], (1, in_dim), jnp.float32),
        "w_gcn1": s * jax.random.normal(ks[4], (layers, in_dim, out_dim), jnp.float32),
        "b_gcn1": s * jax.random.normal(ks[5], (layers, out_dim), jnp.float32),
        "w_gcn2": s * jax.random.normal(ks[6], (layers, in_dim, out_dim), jnp.float32),
        "b_gcn2": s * jax.random.normal(ks[7], (layers, out_dim), jnp.float32),
        "w_f": s * jax.random.normal(ks[8], (out_dim * 2, class_num), jnp.float32),
        "b_f": s * jax.random.normal(ks[9], (1, class_num), jnp.float32),
    }


if __name__ == "__main__":
    B = 16         # graph pairs (blocked 8 per grid step -> grid of 2)
    N = 16         # nodes per graph (dense-padded)
    FEAT = 8       # raw node feature dim
    IN_DIM = 32    # config.gcn['in_dim']
    OUT_DIM = 32   # config.gcn['out_dim']
    LAYERS = 2     # config.gcn['layers']
    CLASS_NUM = 4  # config.class_num

    key = jax.random.PRNGKey(0)
    k_x1, k_x2, k_p = jax.random.split(key, 3)

    x1 = jax.random.normal(k_x1, (B, N, FEAT), jnp.float32)
    x2 = jax.random.normal(k_x2, (B, N, FEAT), jnp.float32)
    node_len1 = (N - (jnp.arange(B) % 3)).astype(jnp.int32)   # exercise node mask
    node_len2 = (N - (jnp.arange(B) % 5)).astype(jnp.int32)
    adj1 = build_normalized_adjacency(node_len1, N)
    adj2 = build_normalized_adjacency(node_len2, N)
    params = init_params(k_p, FEAT, IN_DIM, OUT_DIM, LAYERS, CLASS_NUM)

    probs = run_gcn_model(x1, adj1, node_len1, x2, adj2, node_len2, params)
    probs = jax.block_until_ready(probs)
    ref = gcn_forward_reference(x1, adj1, node_len1, x2, adj2, node_len2, params)

    assert probs.shape == (B, CLASS_NUM)
    assert bool(jnp.all(jnp.isfinite(probs)))
    # exact reciprocal -> softmax rows sum to 1 tightly
    assert bool(jnp.allclose(jnp.sum(probs, axis=-1), 1.0, atol=1e-4))
    # matches the pure-JAX f32 reference (bf16 MXU operands -> relaxed tolerance)
    assert bool(jnp.allclose(probs, ref, atol=3e-2))

    print("KERNEL_OK")
</pallas_src>

<mosaic_0001>
module attributes {stable_mosaic.version = 11 : i64} {
  func.func @fused_gcn_kernel(%arg0: i32, %arg1: memref<1x256x256xbf16, #tpu.memory_space<vmem>>, %arg2: memref<1x256x256xbf16, #tpu.memory_space<vmem>>, %arg3: memref<1x256x1xf32, #tpu.memory_space<vmem>>, %arg4: memref<1x256xf32, #tpu.memory_space<vmem>>, %arg5: memref<1x256x256xbf16, #tpu.memory_space<vmem>>, %arg6: memref<1x1x256xf32, #tpu.memory_space<vmem>>, %arg7: memref<256x128xbf16, #tpu.memory_space<vmem>>, %arg8: memref<1x128xf32, #tpu.memory_space<vmem>>, %arg9: memref<8x128xf32, #tpu.memory_space<vmem>>) attributes {dimension_semantics = [#tpu.dimension_semantics<parallel>], iteration_bounds = array<i64: 2>, scalar_prefetch = 0 : i64, scratch_operands = 0 : i64, tpu.core_type = #tpu.core_type<tc>, window_params = [{transform_indices = @transform_0, window_bounds = array<i64: 1, 256, 256>}, {transform_indices = @transform_1, window_bounds = array<i64: 1, 256, 256>}, {transform_indices = @transform_2, window_bounds = array<i64: 1, 256, 1>}, {pipeline_mode = #tpu.pipeline_mode<synchronous>, transform_indices = @transform_3, window_bounds = array<i64: 1, 256>}, {pipeline_mode = #tpu.pipeline_mode<synchronous>, transform_indices = @transform_4, window_bounds = array<i64: 1, 256, 256>}, {pipeline_mode = #tpu.pipeline_mode<synchronous>, transform_indices = @transform_5, window_bounds = array<i64: 1, 1, 256>}, {pipeline_mode = #tpu.pipeline_mode<synchronous>, transform_indices = @transform_6, window_bounds = array<i64: 256, 128>}, {pipeline_mode = #tpu.pipeline_mode<synchronous>, transform_indices = @transform_7, window_bounds = array<i64: 1, 128>}, {transform_indices = @transform_8, window_bounds = array<i64: 8, 128>}]} {
    %c0 = arith.constant 0 : index
    %c0_0 = arith.constant 0 : index
    %c0_1 = arith.constant 0 : index
    %0 = vector.load %arg2[%c0, %c0_0, %c0_1] : memref<1x256x256xbf16, #tpu.memory_space<vmem>>, vector<1x256x256xbf16>
    %1 = vector.shape_cast %0 : vector<1x256x256xbf16> to vector<256x256xbf16>
    %c0_2 = arith.constant 0 : index
    %c0_3 = arith.constant 0 : index
    %c0_4 = arith.constant 0 : index
    %2 = vector.load %arg1[%c0_2, %c0_3, %c0_4] : memref<1x256x256xbf16, #tpu.memory_space<vmem>>, vector<1x256x256xbf16>
    %3 = vector.shape_cast %2 : vector<1x256x256xbf16> to vector<256x256xbf16>
    %cst = arith.constant dense<0.000000e+00> : vector<256x256xf32>
    %4 = tpu.matmul %1, %3, %cst {dimension_numbers = #tpu.dot_dimension_numbers<[1], [0], [0], [1], [0, 0, 1, 1], [], []>} : vector<256x256xbf16>, vector<256x256xbf16>, vector<256x256xf32> -> vector<256x256xf32>
    %c0_5 = arith.constant 0 : index
    %c0_6 = arith.constant 0 : index
    %5 = vector.load %arg4[%c0_5, %c0_6] : memref<1x256xf32, #tpu.memory_space<vmem>>, vector<1x256xf32>
    %6 = vector.broadcast %5 : vector<1x256xf32> to vector<256x256xf32>
    %7 = arith.addf %4, %6 : vector<256x256xf32>
    %cst_7 = arith.constant 0.000000e+00 : f32
    %8 = vector.broadcast %cst_7 : f32 to vector<256x256xf32>
    %9 = arith.maximumf %7, %8 : vector<256x256xf32>
    %10 = arith.truncf %9 : vector<256x256xf32> to vector<256x256xbf16>
    %c0_8 = arith.constant 0 : index
    %c0_9 = arith.constant 0 : index
    %c0_10 = arith.constant 0 : index
    %11 = vector.load %arg5[%c0_8, %c0_9, %c0_10] : memref<1x256x256xbf16, #tpu.memory_space<vmem>>, vector<1x256x256xbf16>
    %12 = vector.shape_cast %11 : vector<1x256x256xbf16> to vector<256x256xbf16>
    %cst_11 = arith.constant dense<0.000000e+00> : vector<256x256xf32>
    %13 = tpu.matmul %10, %12, %cst_11 {dimension_numbers = #tpu.dot_dimension_numbers<[1], [0], [0], [1], [0, 0, 1, 1], [], []>} : vector<256x256xbf16>, vector<256x256xbf16>, vector<256x256xf32> -> vector<256x256xf32>
    %14 = arith.truncf %13 : vector<256x256xf32> to vector<256x256xbf16>
    %cst_12 = arith.constant dense<0.000000e+00> : vector<256x256xf32>
    %15 = tpu.matmul %1, %14, %cst_12 {dimension_numbers = #tpu.dot_dimension_numbers<[1], [0], [0], [1], [0, 0, 1, 1], [], []>} : vector<256x256xbf16>, vector<256x256xbf16>, vector<256x256xf32> -> vector<256x256xf32>
    %c0_13 = arith.constant 0 : index
    %c0_14 = arith.constant 0 : index
    %c0_15 = arith.constant 0 : index
    %16 = vector.load %arg6[%c0_13, %c0_14, %c0_15] : memref<1x1x256xf32, #tpu.memory_space<vmem>>, vector<1x1x256xf32>
    %17 = vector.shape_cast %16 : vector<1x1x256xf32> to vector<1x256xf32>
    %18 = vector.broadcast %17 : vector<1x256xf32> to vector<256x256xf32>
    %19 = arith.addf %15, %18 : vector<256x256xf32>
    %cst_16 = arith.constant 0.000000e+00 : f32
    %20 = vector.broadcast %cst_16 : f32 to vector<256x256xf32>
    %21 = arith.maximumf %19, %20 : vector<256x256xf32>
    %c0_17 = arith.constant 0 : index
    %c0_18 = arith.constant 0 : index
    %c0_19 = arith.constant 0 : index
    %22 = vector.load %arg3[%c0_17, %c0_18, %c0_19] : memref<1x256x1xf32, #tpu.memory_space<vmem>>, vector<1x256x1xf32>
    %23 = vector.shape_cast %22 : vector<1x256x1xf32> to vector<256x1xf32>
    %24 = vector.broadcast %23 : vector<256x1xf32> to vector<256x256xf32>
    %25 = arith.addf %21, %24 : vector<256x256xf32>
    %26 = vector.shape_cast %25 : vector<256x256xf32> to vector<16x16x256xf32>
    %cst_20 = arith.constant dense<0xFF800000> : vector<16x256xf32>
    %27 = vector.multi_reduction <maximumf>, %26, %cst_20 [1] : vector<16x16x256xf32> to vector<16x256xf32>
    %28 = tpu.iota {dimensions = array<i32: 1>} : vector<8x256xi32>
    %c128_i32 = arith.constant 128 : i32
    %29 = vector.broadcast %c128_i32 : i32 to vector<8x256xi32>
    %30 = arith.cmpi slt, %28, %29 : vector<8x256xi32>
    %31 = vector.extract_strided_slice %27 {offsets = [0, 0], sizes = [8, 256], strides = [1, 1]} : vector<16x256xf32> to vector<8x256xf32>
    %32 = vector.extract_strided_slice %27 {offsets = [8, 0], sizes = [8, 256], strides = [1, 1]} : vector<16x256xf32> to vector<8x256xf32>
    %33 = arith.select %30, %31, %32 : vector<8x256xi1>, vector<8x256xf32>
    %34 = arith.truncf %33 : vector<8x256xf32> to vector<8x256xbf16>
    %c0_21 = arith.constant 0 : index
    %c0_22 = arith.constant 0 : index
    %35 = vector.load %arg7[%c0_21, %c0_22] : memref<256x128xbf16, #tpu.memory_space<vmem>>, vector<256x128xbf16>
    %cst_23 = arith.constant dense<0.000000e+00> : vector<8x128xf32>
    %36 = tpu.matmul %34, %35, %cst_23 {dimension_numbers = #tpu.dot_dimension_numbers<[1], [0], [0], [1], [0, 0, 1, 1], [], []>} : vector<8x256xbf16>, vector<256x128xbf16>, vector<8x128xf32> -> vector<8x128xf32>
    %c0_24 = arith.constant 0 : index
    %c0_25 = arith.constant 0 : index
    %37 = vector.load %arg8[%c0_24, %c0_25] : memref<1x128xf32, #tpu.memory_space<vmem>>, vector<1x128xf32>
    %38 = vector.broadcast %37 : vector<1x128xf32> to vector<8x128xf32>
    %39 = arith.addf %36, %38 : vector<8x128xf32>
    %cst_26 = arith.constant 0.000000e+00 : f32
    %40 = vector.broadcast %cst_26 : f32 to vector<8x128xf32>
    %41 = arith.cmpf ogt, %39, %40 : vector<8x128xf32>
    %cst_27 = arith.constant 0.00999999977 : f32
    %42 = vector.broadcast %cst_27 : f32 to vector<8x128xf32>
    %43 = arith.mulf %42, %39 : vector<8x128xf32>
    %44 = arith.select %41, %39, %43 : vector<8x128xi1>, vector<8x128xf32>
    %cst_28 = arith.constant dense<0xFF800000> : vector<8xf32>
    %45 = vector.multi_reduction <maximumf>, %44, %cst_28 [1] : vector<8x128xf32> to vector<8xf32>
    %46 = vector.shape_cast %45 : vector<8xf32> to vector<8x1xf32>
    %47 = vector.broadcast %46 : vector<8x1xf32> to vector<8x128xf32>
    %48 = arith.subf %44, %47 : vector<8x128xf32>
    %49 = math.exp %48 : vector<8x128xf32>
    %cst_29 = arith.constant dense<0.000000e+00> : vector<8xf32>
    %50 = vector.multi_reduction <add>, %49, %cst_29 [1] : vector<8x128xf32> to vector<8xf32>
    %51 = vector.shape_cast %50 : vector<8xf32> to vector<8x1xf32>
    %52 = vector.broadcast %51 : vector<8x1xf32> to vector<8x128xf32>
    %53 = arith.divf %49, %52 : vector<8x128xf32>
    %c0_30 = arith.constant 0 : index
    %c0_31 = arith.constant 0 : index
    %54 = vector.load %arg9[%c0_30, %c0_31] : memref<8x128xf32, #tpu.memory_space<vmem>>, vector<8x128xf32>
    tpu.vector_store %arg9[%c0_30, %c0_31], %53 {strides = array<i32>} : memref<8x128xf32, #tpu.memory_space<vmem>>, vector<8x128xf32>,
    return
  }
  func.func @transform_0(%arg0: i32) -> (i32, i32, i32) {
    %c0_i32 = arith.constant 0 : i32
    %c0_i32_0 = arith.constant 0 : i32
    %c0_i32_1 = arith.constant 0 : i32
    return %arg0, %c0_i32, %c0_i32_0 : i32, i32, i32
  }
  func.func @transform_1(%arg0: i32) -> (i32, i32, i32) {
    %c0_i32 = arith.constant 0 : i32
    %c0_i32_0 = arith.constant 0 : i32
    %c0_i32_1 = arith.constant 0 : i32
    return %arg0, %c0_i32, %c0_i32_0 : i32, i32, i32
  }
  func.func @transform_2(%arg0: i32) -> (i32, i32, i32) {
    %c0_i32 = arith.constant 0 : i32
    %c0_i32_0 = arith.constant 0 : i32
    %c0_i32_1 = arith.constant 0 : i32
    return %arg0, %c0_i32, %c0_i32_0 : i32, i32, i32
  }
  func.func @transform_3(%arg0: i32) -> (i32, i32) {
    %c0_i32 = arith.constant 0 : i32
    %c0_i32_0 = arith.constant 0 : i32
    %c0_i32_1 = arith.constant 0 : i32
    return %c0_i32, %c0_i32_0 : i32, i32
  }
  func.func @transform_4(%arg0: i32) -> (i32, i32, i32) {
    %c0_i32 = arith.constant 0 : i32
    %c0_i32_0 = arith.constant 0 : i32
    %c0_i32_1 = arith.constant 0 : i32
    %c0_i32_2 = arith.constant 0 : i32
    return %c0_i32, %c0_i32_0, %c0_i32_1 : i32, i32, i32
  }
  func.func @transform_5(%arg0: i32) -> (i32, i32, i32) {
    %c0_i32 = arith.constant 0 : i32
    %c0_i32_0 = arith.constant 0 : i32
    %c0_i32_1 = arith.constant 0 : i32
    %c0_i32_2 = arith.constant 0 : i32
    return %c0_i32, %c0_i32_0, %c0_i32_1 : i32, i32, i32
  }
  func.func @transform_6(%arg0: i32) -> (i32, i32) {
    %c0_i32 = arith.constant 0 : i32
    %c0_i32_0 = arith.constant 0 : i32
    %c0_i32_1 = arith.constant 0 : i32
    return %c0_i32, %c0_i32_0 : i32, i32
  }
  func.func @transform_7(%arg0: i32) -> (i32, i32) {
    %c0_i32 = arith.constant 0 : i32
    %c0_i32_0 = arith.constant 0 : i32
    %c0_i32_1 = arith.constant 0 : i32
    return %c0_i32, %c0_i32_0 : i32, i32
  }
  func.func @transform_8(%arg0: i32) -> (i32, i32) {
    %c0_i32 = arith.constant 0 : i32
    %c0_i32_0 = arith.constant 0 : i32
    return %arg0, %c0_i32 : i32, i32
  }
}

</mosaic_0001>

<llo_original>
// kernel: tpu_custom_call.1
$region0: #{tpu_custom_call.1}
  #allocation0 [shape = 'u32[]', space=smem, size = 0x4, offset = 0x4, fixed_abs, tag = 'smem constant byte address 0x4 - core index']
  #allocation1 [shape = 'u32[144,128]{1,0:T(1,128)}', space=vmem, size = 0x12000, scoped, tag = 'internal scratch']
  %s0 = inlined_call_operand.vmem [shape: bf16[2,256,256], index: 0, kind: input, shape index: {}]
  %s1 = inlined_call_operand.hbm [shape: bf16[2,256,256], index: 1, kind: input, shape index: {}]
  %s2 = inlined_call_operand.vmem [shape: f32[2,256,1], index: 2, kind: input, shape index: {}]
  %s3 = inlined_call_operand.vmem [shape: f32[1,256], index: 3, kind: input, shape index: {}]
  %s4 = inlined_call_operand.hbm [shape: bf16[1,256,256], index: 4, kind: input, shape index: {}]
  %s5 = inlined_call_operand.vmem [shape: f32[1,1,256], index: 5, kind: input, shape index: {}]
  %s6 = inlined_call_operand.hbm [shape: bf16[256,128], index: 6, kind: input, shape index: {}]
  %s7 = inlined_call_operand.vmem [shape: f32[1,128], index: 7, kind: input, shape index: {}]
  %s8 = inlined_call_operand.hbm [shape: f32[16,128], index: 8, kind: output, shape index: {}]
  %s9 = sld [smem:[#allocation0]]
  $region77: #{tpu_custom_call.1} parent=0
    _
  %s11 = ssub.s32 1, %s9
  %s12 = scalar_select 0, %s11, %s9
  $region1: #{tpu_custom_call.1} parent=0
    #allocation2 [shape = 'u8[262144]{0}', space=vmem, size = 0x40000, scoped, tag = 'input window, operand 1']
    #allocation3 [shape = 's32[2]{0}', space=sflag, size = 0x8, scoped, tag = 'scoped memory for tpu_custom_call.1']
    #allocation4 [shape = 's32[2]{0}', space=sflag, size = 0x8, scoped, tag = 'scoped memory for tpu_custom_call.1']
    #allocation5 [shape = 'u8[131072]{0}', space=vmem, size = 0x20000, scoped, tag = 'input window, operand 4, single buffered']
    #allocation6 [shape = 's32[1]{0}', space=sflag, size = 0x4, scoped, tag = 'scoped memory for tpu_custom_call.1']
    #allocation7 [shape = 'u8[65536]{0}', space=vmem, size = 0x10000, scoped, tag = 'input window, operand 6, single buffered']
    #allocation8 [shape = 'u8[8192]{0}', space=vmem, size = 0x2000, scoped, tag = 'output window, operand 0']
    %13 = vsyncpa [#allocation3], 0
    %s14 = scalar_lea.sflag [#allocation3], 1
    %15 = vsyncpa %s14, 0
    %16 = vsyncpa [#allocation6], 0
    %17 = vsyncpa [#allocation4], 0
    %s18 = scalar_lea.sflag [#allocation4], 1
    %19 = vsyncpa %s18, 0
    loop: start=0, step=1, limit=4
    $region2: #{tpu_custom_call.1} parent=1 // loop_pre_header
      _
    $region3: #{tpu_custom_call.1} parent=1 // loop_header
      %s21 = sphi 0, %s25
      %p22 = scmp.ge.s32.totalorder %s21, 4
      %s31 = sphi 0, %s33
      %s34 = sphi 0, %s31
      %s35 = sphi 0, %s34
      %s51 = sphi 0, %s35
      %s57 = sphi 0, %s59
      %s60 = sphi 0, %s57
      %s61 = sphi 0, %s60
      %s77 = sphi 0, %s61
      %s83 = sphi 0, %s85
      %s86 = sphi 0, %s83
      %s87 = sphi 0, %s86
      %s103 = sphi 0, %s87
      %s107 = sphi 0, %s107
      %s109 = sphi 0, %s107
      %s110 = sphi 0, %s109
      %s124 = sphi 0, %s110
      %s128 = sphi 0, %s128
      %s130 = sphi 0, %s128
      %s131 = sphi 0, %s130
      %s145 = sphi 0, %s131
      %s149 = sphi 0, %s149
      %s151 = sphi 0, %s149
      %s152 = sphi 0, %s151
      %s166 = sphi 0, %s152
      %s170 = sphi 0, %s170
      %s172 = sphi 0, %s170
      %s173 = sphi 0, %s172
      %s187 = sphi 0, %s173
      %s191 = sphi 0, %s191
      %s193 = sphi 0, %s191
      %s194 = sphi 0, %s193
      %s208 = sphi 0, %s194
      %s214 = sphi 0, %s216
      %s217 = sphi 0, %s214
      %s218 = sphi 0, %s217
      %s234 = sphi 0, %s218
    $region4: #{tpu_custom_call.1} parent=1 // loop_header_branch
      %24 = sbr.rel (%p22) target = $region8
    $region5: #{tpu_custom_call.1} parent=1 // loop_body
      %s26 = ssub.s32 %s21, 1
      %s27 = ssub.s32 %s21, 2
      %s28 = sadd.s32 %s21, 1
      %s29 = ssub.s32 %s21, %s28
      %p30 = scmp.eq.s32.totalorder %s29, 0
      %s32 = sadd.s32 %s31, 1
      %s33 = scalar_select %p30, %s31, %s32
      %p36 = pneg %p30
      %p37 = scmp.eq.s32.totalorder %s21, 1
      %p38 = por %p36, %p37
      %p39 = scmp.ne.s32.totalorder %s31, %s34
      %p40 = scmp.eq.s32.totalorder %s21, 0
      %p41 = por %p39, %p40
      %p42 = scmp.ne.s32.totalorder %s31, %s34
      %p43 = scmp.eq.s32.totalorder %s26, 1
      %p44 = por %p42, %p43
      %p45 = scmp.ne.s32.totalorder %s34, %s35
      %p46 = scmp.eq.s32.totalorder %s26, 0
      %p47 = por %p45, %p46
      %p48 = scmp.ne.s32.totalorder %s34, %s35
      %p49 = scmp.eq.s32.totalorder %s27, 1
      %p50 = por %p48, %p49
      %p52 = scmp.ne.s32.totalorder %s35, %s51
      %p53 = scmp.eq.s32.totalorder %s27, 0
      %p54 = por %p52, %p53
      %s55 = ssub.s32 %s21, %s28
      %p56 = scmp.eq.s32.totalorder %s55, 0
      %s58 = sadd.s32 %s57, 1
      %s59 = scalar_select %p56, %s57, %s58
      %p62 = pneg %p56
      %p63 = scmp.eq.s32.totalorder %s21, 1
      %p64 = por %p62, %p63
      %p65 = scmp.ne.s32.totalorder %s57, %s60
      %p66 = scmp.eq.s32.totalorder %s21, 0
      %p67 = por %p65, %p66
      %p68 = scmp.ne.s32.totalorder %s57, %s60
      %p69 = scmp.eq.s32.totalorder %s26, 1
      %p70 = por %p68, %p69
      %p71 = scmp.ne.s32.totalorder %s60, %s61
      %p72 = scmp.eq.s32.totalorder %s26, 0
      %p73 = por %p71, %p72
      %p74 = scmp.ne.s32.totalorder %s60, %s61
      %p75 = scmp.eq.s32.totalorder %s27, 1
      %p76 = por %p74, %p75
      %p78 = scmp.ne.s32.totalorder %s61, %s77
      %p79 = scmp.eq.s32.totalorder %s27, 0
      %p80 = por %p78, %p79
      %s81 = ssub.s32 %s21, %s28
      %p82 = scmp.eq.s32.totalorder %s81, 0
      %s84 = sadd.s32 %s83, 1
      %s85 = scalar_select %p82, %s83, %s84
      %p88 = pneg %p82
      %p89 = scmp.eq.s32.totalorder %s21, 1
      %p90 = por %p88, %p89
      %p91 = scmp.ne.s32.totalorder %s83, %s86
      %p92 = scmp.eq.s32.totalorder %s21, 0
      %p93 = por %p91, %p92
      %p94 = scmp.ne.s32.totalorder %s83, %s86
      %p95 = scmp.eq.s32.totalorder %s26, 1
      %p96 = por %p94, %p95
      %p97 = scmp.ne.s32.totalorder %s86, %s87
      %p98 = scmp.eq.s32.totalorder %s26, 0
      %p99 = por %p97, %p98
      %p100 = scmp.ne.s32.totalorder %s86, %s87
      %p101 = scmp.eq.s32.totalorder %s27, 1
      %p102 = por %p100, %p101
      %p104 = scmp.ne.s32.totalorder %s87, %s103
      %p105 = scmp.eq.s32.totalorder %s27, 0
      %p106 = por %p104, %p105
      %s108 = sadd.s32 %s107, 1
      %p111 = scmp.eq.s32.totalorder %s21, 1
      %p112 = scmp.ne.s32.totalorder %s107, %s109
      %p113 = scmp.eq.s32.totalorder %s21, 0
      %p114 = por %p112, %p113
      %p115 = scmp.ne.s32.totalorder %s107, %s109
      %p116 = scmp.eq.s32.totalorder %s26, 1
      %p117 = por %p115, %p116
      %p118 = scmp.ne.s32.totalorder %s109, %s110
      %p119 = scmp.eq.s32.totalorder %s26, 0
      %p120 = por %p118, %p119
      %p121 = scmp.ne.s32.totalorder %s109, %s110
      %p122 = scmp.eq.s32.totalorder %s27, 1
      %p123 = por %p121, %p122
      %p125 = scmp.ne.s32.totalorder %s110, %s124
      %p126 = scmp.eq.s32.totalorder %s27, 0
      %p127 = por %p125, %p126
      %s129 = sadd.s32 %s128, 1
      %p132 = scmp.eq.s32.totalorder %s21, 1
      %p133 = scmp.ne.s32.totalorder %s128, %s130
      %p134 = scmp.eq.s32.totalorder %s21, 0
      %p135 = por %p133, %p134
      %p136 = scmp.ne.s32.totalorder %s128, %s130
      %p137 = scmp.eq.s32.totalorder %s26, 1
      %p138 = por %p136, %p137
      %p139 = scmp.ne.s32.totalorder %s130, %s131
      %p140 = scmp.eq.s32.totalorder %s26, 0
      %p141 = por %p139, %p140
      %p142 = scmp.ne.s32.totalorder %s130, %s131
      %p143 = scmp.eq.s32.totalorder %s27, 1
      %p144 = por %p142, %p143
      %p146 = scmp.ne.s32.totalorder %s131, %s145
      %p147 = scmp.eq.s32.totalorder %s27, 0
      %p148 = por %p146, %p147
      %s150 = sadd.s32 %s149, 1
      %p153 = scmp.eq.s32.totalorder %s21, 1
      %p154 = scmp.ne.s32.totalorder %s149, %s151
      %p155 = scmp.eq.s32.totalorder %s21, 0
      %p156 = por %p154, %p155
      %p157 = scmp.ne.s32.totalorder %s149, %s151
      %p158 = scmp.eq.s32.totalorder %s26, 1
      %p159 = por %p157, %p158
      %p160 = scmp.ne.s32.totalorder %s151, %s152
      %p161 = scmp.eq.s32.totalorder %s26, 0
      %p162 = por %p160, %p161
      %p163 = scmp.ne.s32.totalorder %s151, %s152
      %p164 = scmp.eq.s32.totalorder %s27, 1
      %p165 = por %p163, %p164
      %p167 = scmp.ne.s32.totalorder %s152, %s166
      %p168 = scmp.eq.s32.totalorder %s27, 0
      %p169 = por %p167, %p168
      %s171 = sadd.s32 %s170, 1
      %p174 = scmp.eq.s32.totalorder %s21, 1
      %p175 = scmp.ne.s32.totalorder %s170, %s172
      %p176 = scmp.eq.s32.totalorder %s21, 0
      %p177 = por %p175, %p176
      %p178 = scmp.ne.s32.totalorder %s170, %s172
      %p179 = scmp.eq.s32.totalorder %s26, 1
      %p180 = por %p178, %p179
      %p181 = scmp.ne.s32.totalorder %s172, %s173
      %p182 = scmp.eq.s32.totalorder %s26, 0
      %p183 = por %p181, %p182
      %p184 = scmp.ne.s32.totalorder %s172, %s173
      %p185 = scmp.eq.s32.totalorder %s27, 1
      %p186 = por %p184, %p185
      %p188 = scmp.ne.s32.totalorder %s173, %s187
      %p189 = scmp.eq.s32.totalorder %s27, 0
      %p190 = por %p188, %p189
      %s192 = sadd.s32 %s191, 1
      %p195 = scmp.eq.s32.totalorder %s21, 1
      %p196 = scmp.ne.s32.totalorder %s191, %s193
      %p197 = scmp.eq.s32.totalorder %s21, 0
      %p198 = por %p196, %p197
      %p199 = scmp.ne.s32.totalorder %s191, %s193
      %p200 = scmp.eq.s32.totalorder %s26, 1
      %p201 = por %p199, %p200
      %p202 = scmp.ne.s32.totalorder %s193, %s194
      %p203 = scmp.eq.s32.totalorder %s26, 0
      %p204 = por %p202, %p203
      %p205 = scmp.ne.s32.totalorder %s193, %s194
      %p206 = scmp.eq.s32.totalorder %s27, 1
      %p207 = por %p205, %p206
      %p209 = scmp.ne.s32.totalorder %s194, %s208
      %p210 = scmp.eq.s32.totalorder %s27, 0
      %p211 = por %p209, %p210
      %s212 = ssub.s32 %s21, %s28
      %p213 = scmp.eq.s32.totalorder %s212, 0
      %s215 = sadd.s32 %s214, 1
      %s216 = scalar_select %p213, %s214, %s215
      %p219 = pneg %p213
      %p220 = scmp.eq.s32.totalorder %s21, 1
      %p221 = por %p219, %p220
      %p222 = scmp.ne.s32.totalorder %s214, %s217
      %p223 = scmp.eq.s32.totalorder %s21, 0
      %p224 = por %p222, %p223
      %p225 = scmp.ne.s32.totalorder %s214, %s217
      %p226 = scmp.eq.s32.totalorder %s26, 1
      %p227 = por %p225, %p226
      %p228 = scmp.ne.s32.totalorder %s217, %s218
      %p229 = scmp.eq.s32.totalorder %s26, 0
      %p230 = por %p228, %p229
      %p231 = scmp.ne.s32.totalorder %s217, %s218
      %p232 = scmp.eq.s32.totalorder %s27, 1
      %p233 = por %p231, %p232
      %p235 = scmp.ne.s32.totalorder %s218, %s234
      %p236 = scmp.eq.s32.totalorder %s27, 0
      %p237 = por %p235, %p236
      %p238 = scmp.le.s32.totalorder 1, %s21
      %p239 = scmp.lt.s32.totalorder %s21, 3
      %p240 = pnand %p238, %p239
      %p241 = pneg %p240
      // Predicated region
      $region9: #{tpu_custom_call.1} parent=5 // pred_check
        _
      $region10: #{tpu_custom_call.1} parent=5 // pred_check_branch
        %243 = sbr.rel (%p240) target = $region12
      $region11: #{tpu_custom_call.1} parent=5 // pred_region
        %s244 = ssub.s32 %s21, 1
        // Predicated region
        $region13: #{tpu_custom_call.1} parent=11 // pred_check
          %p245 = pneg %p120
        $region14: #{tpu_custom_call.1} parent=11 // pred_check_branch
          %247 = sbr.rel (%p245) target = $region16
        $region15: #{tpu_custom_call.1} parent=11 // pred_region
          _
        $region16: #{tpu_custom_call.1} parent=11 // pred_fallthru
          _
        // Predicated region
        $region17: #{tpu_custom_call.1} parent=11 // pred_check
          %p248 = pneg %p141
        $region18: #{tpu_custom_call.1} parent=11 // pred_check_branch
          %250 = sbr.rel (%p248) target = $region20
        $region19: #{tpu_custom_call.1} parent=11 // pred_region
          %s252 = ssub.s32 4096, 4096
          %253 = vsyncadd [#allocation6], %s252
          %s254 = sshll.u32 [#allocation5], 4
          %s255 = int_to_ptr.vmem [resolvable:$true] %s254
          %260 = dma.hbm_to_vmem [thread:$0]  %s4, 4096, %s255, [#allocation6], 128, 128, 8
        $region20: #{tpu_custom_call.1} parent=11 // pred_fallthru
          _
        // Predicated region
        $region21: #{tpu_custom_call.1} parent=11 // pred_check
          %p261 = pneg %p162
        $region22: #{tpu_custom_call.1} parent=11 // pred_check_branch
          %263 = sbr.rel (%p261) target = $region24
        $region23: #{tpu_custom_call.1} parent=11 // pred_region
          _
        $region24: #{tpu_custom_call.1} parent=11 // pred_fallthru
          _
        // Predicated region
        $region25: #{tpu_custom_call.1} parent=11 // pred_check
          %p264 = pneg %p183
        $region26: #{tpu_custom_call.1} parent=11 // pred_check_branch
          %266 = sbr.rel (%p264) target = $region28
        $region27: #{tpu_custom_call.1} parent=11 // pred_region
          %s268 = ssub.s32 2048, 2048
          %269 = vsyncadd [#allocation6], %s268
          %s270 = sshll.u32 [#allocation7], 4
          %s271 = int_to_ptr.vmem [resolvable:$true] %s270
          %276 = dma.hbm_to_vmem [thread:$0]  %s6, 2048, %s271, [#allocation6], 64, 64, 4
        $region28: #{tpu_custom_call.1} parent=11 // pred_fallthru
          _
        // Predicated region
        $region29: #{tpu_custom_call.1} parent=11 // pred_check
          %p277 = pneg %p204
        $region30: #{tpu_custom_call.1} parent=11 // pred_check_branch
          %279 = sbr.rel (%p277) target = $region32
        $region31: #{tpu_custom_call.1} parent=11 // pred_region
          _
        $region32: #{tpu_custom_call.1} parent=11 // pred_fallthru
          _
      $region12: #{tpu_custom_call.1} parent=5 // pred_fallthru
        _
      %p280 = scmp.lt.s32.totalorder %s21, 2
      // Predicated region
      $region33: #{tpu_custom_call.1} parent=5 // pred_check
        %p281 = pneg %p280
      $region34: #{tpu_custom_call.1} parent=5 // pred_check_branch
        %283 = sbr.rel (%p281) target = $region36
      $region35: #{tpu_custom_call.1} parent=5 // pred_region
        // Predicated region
        $region37: #{tpu_custom_call.1} parent=35 // pred_check
          %p284 = pneg %p41
        $region38: #{tpu_custom_call.1} parent=35 // pred_check_branch
          %286 = sbr.rel (%p284) target = $region40
        $region39: #{tpu_custom_call.1} parent=35 // pred_region
          %p287 = scmp.lt.s32.totalorder %s21, 1
          %s288 = scalar_select %p287, %s21, 1
          %s289 = smul.addr %s288, 64
          %s290 = smul.addr %s289, 4
          %s291 = scalar_lea.vmem %s0, %s290
        $region40: #{tpu_custom_call.1} parent=35 // pred_fallthru
          _
        // Predicated region
        $region41: #{tpu_custom_call.1} parent=35 // pred_check
          %p292 = pneg %p67
        $region42: #{tpu_custom_call.1} parent=35 // pred_check_branch
          %294 = sbr.rel (%p292) target = $region44
        $region43: #{tpu_custom_call.1} parent=35 // pred_region
          %s295 = sand.u32 %s57, 1
          %s296 = scalar_lea.sflag [#allocation3], %s295
          %s297 = sand.u32 %s57, 1
          %s298 = smul.addr %s297, 256
          %s299 = scalar_lea.vmem [#allocation2], %s298
          %s301 = ssub.s32 4096, 4096
          %302 = vsyncadd %s296, %s301
          %s303 = smul.addr %s21, 64
          %s304 = smul.addr %s303, 64
          %s305 = scalar_lea.hbm %s1, %s304
          %s306 = sshll.u32 %s299, 4
          %s307 = int_to_ptr.vmem [resolvable:$true] %s306
          %312 = dma.hbm_to_vmem [thread:$0]  %s305, 4096, %s307, %s296, 128, 128, 8
        $region44: #{tpu_custom_call.1} parent=35 // pred_fallthru
          _
        // Predicated region
        $region45: #{tpu_custom_call.1} parent=35 // pred_check
          %p313 = pneg %p93
        $region46: #{tpu_custom_call.1} parent=35 // pred_check_branch
          %315 = sbr.rel (%p313) target = $region48
        $region47: #{tpu_custom_call.1} parent=35 // pred_region
          %p316 = scmp.lt.s32.totalorder %s21, 1
          %s317 = scalar_select %p316, %s21, 1
          %s318 = smul.addr %s317, 32
          %s319 = smul.addr %s318, 8
          %s320 = scalar_lea.vmem %s2, %s319
        $region48: #{tpu_custom_call.1} parent=35 // pred_fallthru
          _
      $region36: #{tpu_custom_call.1} parent=5 // pred_fallthru
        _
      %p321 = scmp.le.s32.totalorder 1, %s21
      %p322 = scmp.lt.s32.totalorder %s21, 3
      %p323 = pnand %p321, %p322
      %p324 = pneg %p323
      // Predicated region
      $region49: #{tpu_custom_call.1} parent=5 // pred_check
        _
      $region50: #{tpu_custom_call.1} parent=5 // pred_check_branch
        %326 = sbr.rel (%p323) target = $region52
      $region51: #{tpu_custom_call.1} parent=5 // pred_region
        %s327 = ssub.s32 %s21, 1
        %s328 = sand.u32 %s60, 1
        %s329 = scalar_lea.sflag [#allocation3], %s328
        %s330 = sand.u32 %s60, 1
        %s331 = smul.addr %s330, 256
        %s332 = scalar_lea.vmem [#allocation2], %s331
        // Predicated region
        $region53: #{tpu_custom_call.1} parent=51 // pred_check
          %p333 = pneg %p73
        $region54: #{tpu_custom_call.1} parent=51 // pred_check_branch
          %335 = sbr.rel (%p333) target = $region56
        $region55: #{tpu_custom_call.1} parent=51 // pred_region
          %336 = dma.done %s329, 4096
        $region56: #{tpu_custom_call.1} parent=51 // pred_fallthru
          _
        // Predicated region
        $region57: #{tpu_custom_call.1} parent=51 // pred_check
          %p337 = pneg %p141
        $region58: #{tpu_custom_call.1} parent=51 // pred_check_branch
          %339 = sbr.rel (%p337) target = $region60
        $region59: #{tpu_custom_call.1} parent=51 // pred_region
          %340 = dma.done [#allocation6], 4096
        $region60: #{tpu_custom_call.1} parent=51 // pred_fallthru
          _
        // Predicated region
        $region61: #{tpu_custom_call.1} parent=51 // pred_check
          %p341 = pneg %p183
        $region62: #{tpu_custom_call.1} parent=51 // pred_check_branch
          %343 = sbr.rel (%p341) target = $region64
        $region63: #{tpu_custom_call.1} parent=51 // pred_region
          %344 = dma.done [#allocation6], 2048
        $region64: #{tpu_custom_call.1} parent=51 // pred_fallthru
          _
        %p345 = scmp.lt.s32.totalorder %s26, 1
        %s346 = scalar_select %p345, %s26, 1
        %s347 = smul.addr %s346, 64
        %s348 = smul.addr %s347, 4
        %s349 = scalar_lea.vmem %s0, %s348
        %p350 = pneg %p47
        %p351 = pneg %p44
        %s352 = sand.u32 %s60, 1
        %s353 = scalar_lea.sflag [#allocation3], %s352
        %s354 = sand.u32 %s60, 1
        %s355 = smul.addr %s354, 256
        %s356 = scalar_lea.vmem [#allocation2], %s355
        %p357 = pneg %p73
        %p358 = pneg %p70
        %p359 = scmp.lt.s32.totalorder %s26, 1
        %s360 = scalar_select %p359, %s26, 1
        %s361 = smul.addr %s360, 32
        %s362 = smul.addr %s361, 8
        %s363 = scalar_lea.vmem %s2, %s362
        %p364 = pneg %p99
        %p365 = pneg %p96
        %p366 = pneg %p120
        %p367 = pneg %p117
        %p368 = pneg %p141
        %p369 = pneg %p138
        %p370 = pneg %p162
        %p371 = pneg %p159
        %p372 = pneg %p183
        %p373 = pneg %p180
        %p374 = pneg %p204
        %p375 = pneg %p201
        %p376 = pneg %p230
        %p377 = pneg %p227
        %s378 = sand.u32 %s217, 1
        %s379 = scalar_lea.sflag [#allocation4], %s378
        %s380 = sand.u32 %s217, 1
        %s381 = smul.addr %s380, 8
        %s382 = scalar_lea.vmem [#allocation8], %s381
        %p383 = scmp.lt.s32.totalorder %s26, 1
        %s384 = scalar_select %p383, %s26, 1
        %s385 = smul.addr %s384, 64
        %s386 = smul.addr %s385, 4
        %s387 = scalar_lea.vmem %s0, %s386
        %p388 = scmp.lt.s32.totalorder %s26, 1
        %s389 = scalar_select %p388, %s26, 1
        %s390 = smul.addr %s389, 32
        %s391 = smul.addr %s390, 8
        %s392 = scalar_lea.vmem %s2, %s391
        %v394 = vld [vmem:[%s332] sm:$0xff]
        %v395 = vld [vmem:[%s332 + $0x8] sm:$0xff]
        %v396 = vld [vmem:[%s332 + $0x10] sm:$0xff]
        %v397 = vld [vmem:[%s332 + $0x18] sm:$0xff]
        %v398 = vld [vmem:[%s332 + $0x20] sm:$0xff]
        %v399 = vld [vmem:[%s332 + $0x28] sm:$0xff]
        %v400 = vld [vmem:[%s332 + $0x30] sm:$0xff]
        %v401 = vld [vmem:[%s332 + $0x38] sm:$0xff]
        %v402 = vld [vmem:[%s332 + $0x40] sm:$0xff]
        %v403 = vld [vmem:[%s332 + $0x48] sm:$0xff]
        %v404 = vld [vmem:[%s332 + $0x50] sm:$0xff]
        %v405 = vld [vmem:[%s332 + $0x58] sm:$0xff]
        %v406 = vld [vmem:[%s332 + $0x60] sm:$0xff]
        %v407 = vld [vmem:[%s332 + $0x68] sm:$0xff]
        %v408 = vld [vmem:[%s332 + $0x70] sm:$0xff]
        %v409 = vld [vmem:[%s332 + $0x78] sm:$0xff]
        %v410 = vld [vmem:[%s332 + $0x80] sm:$0xff]
        %v411 = vld [vmem:[%s332 + $0x88] sm:$0xff]
        %v412 = vld [vmem:[%s332 + $0x90] sm:$0xff]
        %v413 = vld [vmem:[%s332 + $0x98] sm:$0xff]
        %v414 = vld [vmem:[%s332 + $0xa0] sm:$0xff]
        %v415 = vld [vmem:[%s332 + $0xa8] sm:$0xff]
        %v416 = vld [vmem:[%s332 + $0xb0] sm:$0xff]
        %v417 = vld [vmem:[%s332 + $0xb8] sm:$0xff]
        %v418 = vld [vmem:[%s332 + $0xc0] sm:$0xff]
        %v419 = vld [vmem:[%s332 + $0xc8] sm:$0xff]
        %v420 = vld [vmem:[%s332 + $0xd0] sm:$0xff]
        %v421 = vld [vmem:[%s332 + $0xd8] sm:$0xff]
        %v422 = vld [vmem:[%s332 + $0xe0] sm:$0xff]
        %v423 = vld [vmem:[%s332 + $0xe8] sm:$0xff]
        %v424 = vld [vmem:[%s332 + $0xf0] sm:$0xff]
        %v425 = vld [vmem:[%s332 + $0xf8] sm:$0xff]
        %v426 = vld [vmem:[%s387] sm:$0xff]
        %v427 = vld [vmem:[%s387 + $0x8] sm:$0xff]
        %v428 = vld [vmem:[%s387 + $0x10] sm:$0xff]
        %v429 = vld [vmem:[%s387 + $0x18] sm:$0xff]
        %v430 = vld [vmem:[%s387 + $0x20] sm:$0xff]
        %v431 = vld [vmem:[%s387 + $0x28] sm:$0xff]
        %v432 = vld [vmem:[%s387 + $0x30] sm:$0xff]
        %v433 = vld [vmem:[%s387 + $0x38] sm:$0xff]
        %v434 = vld [vmem:[%s387 + $0x40] sm:$0xff]
        %v435 = vld [vmem:[%s387 + $0x48] sm:$0xff]
        %v436 = vld [vmem:[%s387 + $0x50] sm:$0xff]
        %v437 = vld [vmem:[%s387 + $0x58] sm:$0xff]
        %v438 = vld [vmem:[%s387 + $0x60] sm:$0xff]
        %v439 = vld [vmem:[%s387 + $0x68] sm:$0xff]
        %v440 = vld [vmem:[%s387 + $0x70] sm:$0xff]
        %v441 = vld [vmem:[%s387 + $0x78] sm:$0xff]
        %v442 = vld [vmem:[%s387 + $0x80] sm:$0xff]
        %v443 = vld [vmem:[%s387 + $0x88] sm:$0xff]
        %v444 = vld [vmem:[%s387 + $0x90] sm:$0xff]
        %v445 = vld [vmem:[%s387 + $0x98] sm:$0xff]
        %v446 = vld [vmem:[%s387 + $0xa0] sm:$0xff]
        %v447 = vld [vmem:[%s387 + $0xa8] sm:$0xff]
        %v448 = vld [vmem:[%s387 + $0xb0] sm:$0xff]
        %v449 = vld [vmem:[%s387 + $0xb8] sm:$0xff]
        %v450 = vld [vmem:[%s387 + $0xc0] sm:$0xff]
        %v451 = vld [vmem:[%s387 + $0xc8] sm:$0xff]
        %v452 = vld [vmem:[%s387 + $0xd0] sm:$0xff]
        %v453 = vld [vmem:[%s387 + $0xd8] sm:$0xff]
        %v454 = vld [vmem:[%s387 + $0xe0] sm:$0xff]
        %v455 = vld [vmem:[%s387 + $0xe8] sm:$0xff]
        %v456 = vld [vmem:[%s387 + $0xf0] sm:$0xff]
        %v457 = vld [vmem:[%s387 + $0xf8] sm:$0xff]
        %v458 = vld [vmem:[%s3] sm:$0x3]
        %v460 = vlaneseq
        %v461 = vshrl.u32 %v460, 7
        %v462 = vsub.s32 0, %v461
        %v463 = vrot.slane %v458, %v462
        %v464 = vlaneseq
        %v465 = vshrl.u32 %v464, 7
        %v466 = vsub.s32 1, %v465
        %v467 = vrot.slane %v458, %v466
        %v502 = vunpack.c.l.b16 %v394
        %v503 = vunpack.c.h.b16 %v394
        %v504 = vunpack.c.l.b16 %v395
        %v505 = vunpack.c.h.b16 %v395
        %v506 = vunpack.c.l.b16 %v396
        %v507 = vunpack.c.h.b16 %v396
        %v508 = vunpack.c.l.b16 %v397
        %v509 = vunpack.c.h.b16 %v397
        %v510 = vunpack.c.l.b16 %v398
        %v511 = vunpack.c.h.b16 %v398
        %v512 = vunpack.c.l.b16 %v399
        %v513 = vunpack.c.h.b16 %v399
        %v514 = vunpack.c.l.b16 %v400
        %v515 = vunpack.c.h.b16 %v400
        %v516 = vunpack.c.l.b16 %v401
        %v517 = vunpack.c.h.b16 %v401
        %v518 = vunpack.c.l.b16 %v402
        %v519 = vunpack.c.h.b16 %v402
        %v520 = vunpack.c.l.b16 %v403
        %v521 = vunpack.c.h.b16 %v403
        %v522 = vunpack.c.l.b16 %v404
        %v523 = vunpack.c.h.b16 %v404
        %v524 = vunpack.c.l.b16 %v405
        %v525 = vunpack.c.h.b16 %v405
        %v526 = vunpack.c.l.b16 %v406
        %v527 = vunpack.c.h.b16 %v406
        %v528 = vunpack.c.l.b16 %v407
        %v529 = vunpack.c.h.b16 %v407
        %v530 = vunpack.c.l.b16 %v408
        %v531 = vunpack.c.h.b16 %v408
        %v532 = vunpack.c.l.b16 %v409
        %v533 = vunpack.c.h.b16 %v409
        %v534 = vunpack.c.l.b16 %v410
        %v535 = vunpack.c.h.b16 %v410
        %v536 = vunpack.c.l.b16 %v411
        %v537 = vunpack.c.h.b16 %v411
        %v538 = vunpack.c.l.b16 %v412
        %v539 = vunpack.c.h.b16 %v412
        %v540 = vunpack.c.l.b16 %v413
        %v541 = vunpack.c.h.b16 %v413
        %v542 = vunpack.c.l.b16 %v414
        %v543 = vunpack.c.h.b16 %v414
        %v544 = vunpack.c.l.b16 %v415
        %v545 = vunpack.c.h.b16 %v415
        %v546 = vunpack.c.l.b16 %v416
        %v547 = vunpack.c.h.b16 %v416
        %v548 = vunpack.c.l.b16 %v417
        %v549 = vunpack.c.h.b16 %v417
        %v550 = vunpack.c.l.b16 %v418
        %v551 = vunpack.c.h.b16 %v418
        %v552 = vunpack.c.l.b16 %v419
        %v553 = vunpack.c.h.b16 %v419
        %v554 = vunpack.c.l.b16 %v420
        %v555 = vunpack.c.h.b16 %v420
        %v556 = vunpack.c.l.b16 %v421
        %v557 = vunpack.c.h.b16 %v421
        %v558 = vunpack.c.l.b16 %v422
        %v559 = vunpack.c.h.b16 %v422
        %v560 = vunpack.c.l.b16 %v423
        %v561 = vunpack.c.h.b16 %v423
        %v562 = vunpack.c.l.b16 %v424
        %v563 = vunpack.c.h.b16 %v424
        %v564 = vunpack.c.l.b16 %v425
        %v565 = vunpack.c.h.b16 %v425
        %v566 = vpack.c.b16 %v504, %v502
        %v567 = vpack.c.b16 %v505, %v503
        %v568 = vpack.c.b16 %v508, %v506
        %v569 = vpack.c.b16 %v509, %v507
        %v570 = vpack.c.b16 %v512, %v510
        %v571 = vpack.c.b16 %v513, %v511
        %v572 = vpack.c.b16 %v516, %v514
        %v573 = vpack.c.b16 %v517, %v515
        %v574 = vpack.c.b16 %v520, %v518
        %v575 = vpack.c.b16 %v521, %v519
        %v576 = vpack.c.b16 %v524, %v522
        %v577 = vpack.c.b16 %v525, %v523
        %v578 = vpack.c.b16 %v528, %v526
        %v579 = vpack.c.b16 %v529, %v527
        %v580 = vpack.c.b16 %v532, %v530
        %v581 = vpack.c.b16 %v533, %v531
        %v582 = vpack.c.b16 %v536, %v534
        %v583 = vpack.c.b16 %v537, %v535
        %v584 = vpack.c.b16 %v540, %v538
        %v585 = vpack.c.b16 %v541, %v539
        %v586 = vpack.c.b16 %v544, %v542
        %v587 = vpack.c.b16 %v545, %v543
        %v588 = vpack.c.b16 %v548, %v546
        %v589 = vpack.c.b16 %v549, %v547
        %v590 = vpack.c.b16 %v552, %v550
        %v591 = vpack.c.b16 %v553, %v551
        %v592 = vpack.c.b16 %v556, %v554
        %v593 = vpack.c.b16 %v557, %v555
        %v594 = vpack.c.b16 %v560, %v558
        %v595 = vpack.c.b16 %v561, %v559
        %v596 = vpack.c.b16 %v564, %v562
        %v597 = vpack.c.b16 %v565, %v563
        %v662 = vunpack.c.l.b16 %v426
        %v663 = vunpack.c.h.b16 %v426
        %v664 = vunpack.c.l.b16 %v427
        %v665 = vunpack.c.h.b16 %v427
        %v666 = vunpack.c.l.b16 %v428
        %v667 = vunpack.c.h.b16 %v428
        %v668 = vunpack.c.l.b16 %v429
        %v669 = vunpack.c.h.b16 %v429
        %v670 = vunpack.c.l.b16 %v430
        %v671 = vunpack.c.h.b16 %v430
        %v672 = vunpack.c.l.b16 %v431
        %v673 = vunpack.c.h.b16 %v431
        %v674 = vunpack.c.l.b16 %v432
        %v675 = vunpack.c.h.b16 %v432
        %v676 = vunpack.c.l.b16 %v433
        %v677 = vunpack.c.h.b16 %v433
        %v678 = vunpack.c.l.b16 %v434
        %v679 = vunpack.c.h.b16 %v434
        %v680 = vunpack.c.l.b16 %v435
        %v681 = vunpack.c.h.b16 %v435
        %v682 = vunpack.c.l.b16 %v436
        %v683 = vunpack.c.h.b16 %v436
        %v684 = vunpack.c.l.b16 %v437
        %v685 = vunpack.c.h.b16 %v437
        %v686 = vunpack.c.l.b16 %v438
        %v687 = vunpack.c.h.b16 %v438
        %v688 = vunpack.c.l.b16 %v439
        %v689 = vunpack.c.h.b16 %v439
        %v690 = vunpack.c.l.b16 %v440
        %v691 = vunpack.c.h.b16 %v440
        %v692 = vunpack.c.l.b16 %v441
        %v693 = vunpack.c.h.b16 %v441
        %v694 = vunpack.c.l.b16 %v442
        %v695 = vunpack.c.h.b16 %v442
        %v696 = vunpack.c.l.b16 %v443
        %v697 = vunpack.c.h.b16 %v443
        %v698 = vunpack.c.l.b16 %v444
        %v699 = vunpack.c.h.b16 %v444
        %v700 = vunpack.c.l.b16 %v445
        %v701 = vunpack.c.h.b16 %v445
        %v702 = vunpack.c.l.b16 %v446
        %v703 = vunpack.c.h.b16 %v446
        %v704 = vunpack.c.l.b16 %v447
        %v705 = vunpack.c.h.b16 %v447
        %v706 = vunpack.c.l.b16 %v448
        %v707 = vunpack.c.h.b16 %v448
        %v708 = vunpack.c.l.b16 %v449
        %v709 = vunpack.c.h.b16 %v449
        %v710 = vunpack.c.l.b16 %v450
        %v711 = vunpack.c.h.b16 %v450
        %v712 = vunpack.c.l.b16 %v451
        %v713 = vunpack.c.h.b16 %v451
        %v714 = vunpack.c.l.b16 %v452
        %v715 = vunpack.c.h.b16 %v452
        %v716 = vunpack.c.l.b16 %v453
        %v717 = vunpack.c.h.b16 %v453
        %v718 = vunpack.c.l.b16 %v454
        %v719 = vunpack.c.h.b16 %v454
        %v720 = vunpack.c.l.b16 %v455
        %v721 = vunpack.c.h.b16 %v455
        %v722 = vunpack.c.l.b16 %v456
        %v723 = vunpack.c.h.b16 %v456
        %v724 = vunpack.c.l.b16 %v457
        %v725 = vunpack.c.h.b16 %v457
        %v726 = vpack.c.b16 %v664, %v662
        %v727 = vpack.c.b16 %v665, %v663
        %v728 = vpack.c.b16 %v668, %v666
        %v729 = vpack.c.b16 %v669, %v667
        %v730 = vpack.c.b16 %v672, %v670
        %v731 = vpack.c.b16 %v673, %v671
        %v732 = vpack.c.b16 %v676, %v674
        %v733 = vpack.c.b16 %v677, %v675
        %v734 = vpack.c.b16 %v680, %v678
        %v735 = vpack.c.b16 %v681, %v679
        %v736 = vpack.c.b16 %v684, %v682
        %v737 = vpack.c.b16 %v685, %v683
        %v738 = vpack.c.b16 %v688, %v686
        %v739 = vpack.c.b16 %v689, %v687
        %v740 = vpack.c.b16 %v692, %v690
        %v741 = vpack.c.b16 %v693, %v691
        %v742 = vpack.c.b16 %v696, %v694
        %v743 = vpack.c.b16 %v697, %v695
        %v744 = vpack.c.b16 %v700, %v698
        %v745 = vpack.c.b16 %v701, %v699
        %v746 = vpack.c.b16 %v704, %v702
        %v747 = vpack.c.b16 %v705, %v703
        %v748 = vpack.c.b16 %v708, %v706
        %v749 = vpack.c.b16 %v709, %v707
        %v750 = vpack.c.b16 %v712, %v710
        %v751 = vpack.c.b16 %v713, %v711
        %v752 = vpack.c.b16 %v716, %v714
        %v753 = vpack.c.b16 %v717, %v715
        %v754 = vpack.c.b16 %v720, %v718
        %v755 = vpack.c.b16 %v721, %v719
        %v756 = vpack.c.b16 %v724, %v722
        %v757 = vpack.c.b16 %v725, %v723
        %790 = vmatprep.subr.bf16.mxu0 %v727
        %791 = vmatpush1.bf16.msra.mxu0 %v726
        %792 = vmatprep.subr.bf16.mxu0 %v729
        %793 = vmatpush1.bf16.msra.mxu0 %v728
        %794 = vmatprep.subr.bf16.mxu0 %v731
        %795 = vmatpush1.bf16.msra.mxu0 %v730
        %796 = vmatprep.subr.bf16.mxu0 %v733
        %797 = vmatpush1.bf16.msra.mxu0 %v732
        %798 = vmatprep.subr.bf16.mxu0 %v735
        %799 = vmatpush1.bf16.msra.mxu0 %v734
        %800 = vmatprep.subr.bf16.mxu0 %v737
        %801 = vmatpush1.bf16.msra.mxu0 %v736
        %802 = vmatprep.subr.bf16.mxu0 %v739
        %803 = vmatpush1.bf16.msra.mxu0 %v738
        %804 = vmatprep.subr.bf16.mxu0 %v741
        %805 = vmatpush1.bf16.msra.mxu0 %v740
        %806 = vmatprep.subr.bf16.mxu0 %v743
        %807 = vmatpush1.bf16.msra.mxu0 %v742
        %808 = vmatprep.subr.bf16.mxu0 %v745
        %809 = vmatpush1.bf16.msra.mxu0 %v744
        %810 = vmatprep.subr.bf16.mxu0 %v747
        %811 = vmatpush1.bf16.msra.mxu0 %v746
        %812 = vmatprep.subr.bf16.mxu0 %v749
        %813 = vmatpush1.bf16.msra.mxu0 %v748
        %814 = vmatprep.subr.bf16.mxu0 %v751
        %815 = vmatpush1.bf16.msra.mxu0 %v750
        %816 = vmatprep.subr.bf16.mxu0 %v753
        %817 = vmatpush1.bf16.msra.mxu0 %v752
        %818 = vmatprep.subr.bf16.mxu0 %v755
        %819 = vmatpush1.bf16.msra.mxu0 %v754
        %820 = vmatprep.subr.bf16.mxu0 %v757
        %821 = vmatpush1.bf16.msra.mxu0 %v756
        %822 = vmatprep.mubr.bf16.mxu0 %v567
        %823 = vmatmul.mubr.bf16.gmra.mrb[0].mxu0 %v566
        %v824 = vpop.f32.mrb[0].mxu0
        %v825 = vadd.f32 %v463, %v824
        %v826 = vpop.f32.mrb[0].mxu0
        %v827 = vadd.f32 %v467, %v826
        %v828 = vpop.f32.mrb[0].mxu0
        %v829 = vadd.f32 %v463, %v828
        %v830 = vpop.f32.mrb[0].mxu0
        %v831 = vadd.f32 %v467, %v830
        %832 = vmatprep.mubr.bf16.mxu0 %v569
        %833 = vmatmul.mubr.bf16.gmra.mrb[0].mxu0 %v568
        %v834 = vpop.f32.mrb[0].mxu0
        %v835 = vadd.f32 %v463, %v834
        %v836 = vpop.f32.mrb[0].mxu0
        %v837 = vadd.f32 %v467, %v836
        %v838 = vpop.f32.mrb[0].mxu0
        %v839 = vadd.f32 %v463, %v838
        %v840 = vpop.f32.mrb[0].mxu0
        %v841 = vadd.f32 %v467, %v840
        %842 = vmatprep.mubr.bf16.mxu0 %v571
        %843 = vmatmul.mubr.bf16.gmra.mrb[0].mxu0 %v570
        %v844 = vpop.f32.mrb[0].mxu0
        %v845 = vadd.f32 %v463, %v844
        %v846 = vpop.f32.mrb[0].mxu0
        %v847 = vadd.f32 %v467, %v846
        %v848 = vpop.f32.mrb[0].mxu0
        %v849 = vadd.f32 %v463, %v848
        %v850 = vpop.f32.mrb[0].mxu0
        %v851 = vadd.f32 %v467, %v850
        %852 = vmatprep.mubr.bf16.mxu0 %v573
        %853 = vmatmul.mubr.bf16.gmra.mrb[0].mxu0 %v572
        %v854 = vpop.f32.mrb[0].mxu0
        %v855 = vadd.f32 %v463, %v854
        %v856 = vpop.f32.mrb[0].mxu0
        %v857 = vadd.f32 %v467, %v856
        %v858 = vpop.f32.mrb[0].mxu0
        %v859 = vadd.f32 %v463, %v858
        %v860 = vpop.f32.mrb[0].mxu0
        %v861 = vadd.f32 %v467, %v860
        %862 = vmatprep.mubr.bf16.mxu0 %v575
        %863 = vmatmul.mubr.bf16.gmra.mrb[0].mxu0 %v574
        %v864 = vpop.f32.mrb[0].mxu0
        %v865 = vadd.f32 %v463, %v864
        %v866 = vpop.f32.mrb[0].mxu0
        %v867 = vadd.f32 %v467, %v866
        %v868 = vpop.f32.mrb[0].mxu0
        %v869 = vadd.f32 %v463, %v868
        %v870 = vpop.f32.mrb[0].mxu0
        %v871 = vadd.f32 %v467, %v870
        %872 = vmatprep.mubr.bf16.mxu0 %v577
        %873 = vmatmul.mubr.bf16.gmra.mrb[0].mxu0 %v576
        %v874 = vpop.f32.mrb[0].mxu0
        %v875 = vadd.f32 %v463, %v874
        %v876 = vpop.f32.mrb[0].mxu0
        %v877 = vadd.f32 %v467, %v876
        %v878 = vpop.f32.mrb[0].mxu0
        %v879 = vadd.f32 %v463, %v878
        %v880 = vpop.f32.mrb[0].mxu0
        %v881 = vadd.f32 %v467, %v880
        %882 = vmatprep.mubr.bf16.mxu0 %v579
        %883 = vmatmul.mubr.bf16.gmra.mrb[0].mxu0 %v578
        %v884 = vpop.f32.mrb[0].mxu0
        %v885 = vadd.f32 %v463, %v884
        %v886 = vpop.f32.mrb[0].mxu0
        %v887 = vadd.f32 %v467, %v886
        %v888 = vpop.f32.mrb[0].mxu0
        %v889 = vadd.f32 %v463, %v888
        %v890 = vpop.f32.mrb[0].mxu0
        %v891 = vadd.f32 %v467, %v890
        %892 = vmatprep.mubr.bf16.mxu0 %v581
        %893 = vmatmul.mubr.bf16.gmra.mrb[0].mxu0 %v580
        %v894 = vpop.f32.mrb[0].mxu0
        %v895 = vadd.f32 %v463, %v894
        %v896 = vpop.f32.mrb[0].mxu0
        %v897 = vadd.f32 %v467, %v896
        %v898 = vpop.f32.mrb[0].mxu0
        %v899 = vadd.f32 %v463, %v898
        %v900 = vpop.f32.mrb[0].mxu0
        %v901 = vadd.f32 %v467, %v900
        %902 = vmatprep.mubr.bf16.mxu0 %v583
        %903 = vmatmul.mubr.bf16.gmra.mrb[0].mxu0 %v582
        %v904 = vpop.f32.mrb[0].mxu0
        %v905 = vadd.f32 %v463, %v904
        %v906 = vpop.f32.mrb[0].mxu0
        %v907 = vadd.f32 %v467, %v906
        %v908 = vpop.f32.mrb[0].mxu0
        %v909 = vadd.f32 %v463, %v908
        %v910 = vpop.f32.mrb[0].mxu0
        %v911 = vadd.f32 %v467, %v910
        %912 = vmatprep.mubr.bf16.mxu0 %v585
        %913 = vmatmul.mubr.bf16.gmra.mrb[0].mxu0 %v584
        %v914 = vpop.f32.mrb[0].mxu0
        %v915 = vadd.f32 %v463, %v914
        %v916 = vpop.f32.mrb[0].mxu0
        %v917 = vadd.f32 %v467, %v916
        %v918 = vpop.f32.mrb[0].mxu0
        %v919 = vadd.f32 %v463, %v918
        %v920 = vpop.f32.mrb[0].mxu0
        %v921 = vadd.f32 %v467, %v920
        %922 = vmatprep.mubr.bf16.mxu0 %v587
        %923 = vmatmul.mubr.bf16.gmra.mrb[0].mxu0 %v586
        %v924 = vpop.f32.mrb[0].mxu0
        %v925 = vadd.f32 %v463, %v924
        %v926 = vpop.f32.mrb[0].mxu0
        %v927 = vadd.f32 %v467, %v926
        %v928 = vpop.f32.mrb[0].mxu0
        %v929 = vadd.f32 %v463, %v928
        %v930 = vpop.f32.mrb[0].mxu0
        %v931 = vadd.f32 %v467, %v930
        %932 = vmatprep.mubr.bf16.mxu0 %v589
        %933 = vmatmul.mubr.bf16.gmra.mrb[0].mxu0 %v588
        %v934 = vpop.f32.mrb[0].mxu0
        %v935 = vadd.f32 %v463, %v934
        %v936 = vpop.f32.mrb[0].mxu0
        %v937 = vadd.f32 %v467, %v936
        %v938 = vpop.f32.mrb[0].mxu0
        %v939 = vadd.f32 %v463, %v938
        %v940 = vpop.f32.mrb[0].mxu0
        %v941 = vadd.f32 %v467, %v940
        %942 = vmatprep.mubr.bf16.mxu0 %v591
        %943 = vmatmul.mubr.bf16.gmra.mrb[0].mxu0 %v590
        %v944 = vpop.f32.mrb[0].mxu0
        %v945 = vadd.f32 %v463, %v944
        %v946 = vpop.f32.mrb[0].mxu0
        %v947 = vadd.f32 %v467, %v946
        %v948 = vpop.f32.mrb[0].mxu0
        %v949 = vadd.f32 %v463, %v948
        %v950 = vpop.f32.mrb[0].mxu0
        %v951 = vadd.f32 %v467, %v950
        %952 = vmatprep.mubr.bf16.mxu0 %v593
        %953 = vmatmul.mubr.bf16.gmra.mrb[0].mxu0 %v592
        %v954 = vpop.f32.mrb[0].mxu0
        %v955 = vadd.f32 %v463, %v954
        %v956 = vpop.f32.mrb[0].mxu0
        %v957 = vadd.f32 %v467, %v956
        %v958 = vpop.f32.mrb[0].mxu0
        %v959 = vadd.f32 %v463, %v958
        %v960 = vpop.f32.mrb[0].mxu0
        %v961 = vadd.f32 %v467, %v960
        %962 = vmatprep.mubr.bf16.mxu0 %v595
        %963 = vmatmul.mubr.bf16.gmra.mrb[0].mxu0 %v594
        %v964 = vpop.f32.mrb[0].mxu0
        %v965 = vadd.f32 %v463, %v964
        %v966 = vpop.f32.mrb[0].mxu0
        %v967 = vadd.f32 %v467, %v966
        %v968 = vpop.f32.mrb[0].mxu0
        %v969 = vadd.f32 %v463, %v968
        %v970 = vpop.f32.mrb[0].mxu0
        %v971 = vadd.f32 %v467, %v970
        %972 = vmatprep.mubr.bf16.mxu0 %v597
        %973 = vmatmul.mubr.bf16.gmra.mrb[0].mxu0 %v596
        %v974 = vpop.f32.mrb[0].mxu0
        %v975 = vadd.f32 %v463, %v974
        %v976 = vpop.f32.mrb[0].mxu0
        %v977 = vadd.f32 %v467, %v976
        %v978 = vpop.f32.mrb[0].mxu0
        %v979 = vadd.f32 %v463, %v978
        %v980 = vpop.f32.mrb[0].mxu0
        %v981 = vadd.f32 %v467, %v980
        %982 = vdwg.mxu0
        %v983 = vmax.f32 %v825, 0.0
        %v984 = vmax.f32 %v827, 0.0
        %v985 = vmax.f32 %v829, 0.0
        %v986 = vmax.f32 %v831, 0.0
        %v987 = vmax.f32 %v835, 0.0
        %v988 = vmax.f32 %v837, 0.0
        %v989 = vmax.f32 %v839, 0.0
        %v990 = vmax.f32 %v841, 0.0
        %v991 = vmax.f32 %v845, 0.0
        %v992 = vmax.f32 %v847, 0.0
        %v993 = vmax.f32 %v849, 0.0
        %v994 = vmax.f32 %v851, 0.0
        %v995 = vmax.f32 %v855, 0.0
        %v996 = vmax.f32 %v857, 0.0
        %v997 = vmax.f32 %v859, 0.0
        %v998 = vmax.f32 %v861, 0.0
        %v999 = vmax.f32 %v865, 0.0
        %v1000 = vmax.f32 %v867, 0.0
        %v1001 = vmax.f32 %v869, 0.0
        %v1002 = vmax.f32 %v871, 0.0
        %v1003 = vmax.f32 %v875, 0.0
        %v1004 = vmax.f32 %v877, 0.0
        %v1005 = vmax.f32 %v879, 0.0
        %v1006 = vmax.f32 %v881, 0.0
        %v1007 = vmax.f32 %v885, 0.0
        %v1008 = vmax.f32 %v887, 0.0
        %v1009 = vmax.f32 %v889, 0.0
        %v1010 = vmax.f32 %v891, 0.0
        %v1011 = vmax.f32 %v895, 0.0
        %v1012 = vmax.f32 %v897, 0.0
        %v1013 = vmax.f32 %v899, 0.0
        %v1014 = vmax.f32 %v901, 0.0
        %v1015 = vmax.f32 %v905, 0.0
        %v1016 = vmax.f32 %v907, 0.0
        %v1017 = vmax.f32 %v909, 0.0
        %v1018 = vmax.f32 %v911, 0.0
        %v1019 = vmax.f32 %v915, 0.0
        %v1020 = vmax.f32 %v917, 0.0
        %v1021 = vmax.f32 %v919, 0.0
        %v1022 = vmax.f32 %v921, 0.0
        %v1023 = vmax.f32 %v925, 0.0
        %v1024 = vmax.f32 %v927, 0.0
        %v1025 = vmax.f32 %v929, 0.0
        %v1026 = vmax.f32 %v931, 0.0
        %v1027 = vmax.f32 %v935, 0.0
        %v1028 = vmax.f32 %v937, 0.0
        %v1029 = vmax.f32 %v939, 0.0
        %v1030 = vmax.f32 %v941, 0.0
        %v1031 = vmax.f32 %v945, 0.0
        %v1032 = vmax.f32 %v947, 0.0
        %v1033 = vmax.f32 %v949, 0.0
        %v1034 = vmax.f32 %v951, 0.0
        %v1035 = vmax.f32 %v955, 0.0
        %v1036 = vmax.f32 %v957, 0.0
        %v1037 = vmax.f32 %v959, 0.0
        %v1038 = vmax.f32 %v961, 0.0
        %v1039 = vmax.f32 %v965, 0.0
        %v1040 = vmax.f32 %v967, 0.0
        %v1041 = vmax.f32 %v969, 0.0
        %v1042 = vmax.f32 %v971, 0.0
        %v1043 = vmax.f32 %v975, 0.0
        %v1044 = vmax.f32 %v977, 0.0
        %v1045 = vmax.f32 %v979, 0.0
        %v1046 = vmax.f32 %v981, 0.0
        %v1047 = vpack.c.bf16 %v985, %v983
        %v1048 = vpack.c.bf16 %v986, %v984
        %v1049 = vpack.c.bf16 %v989, %v987
        %v1050 = vpack.c.bf16 %v990, %v988
        %v1051 = vpack.c.bf16 %v993, %v991
        %v1052 = vpack.c.bf16 %v994, %v992
        %v1053 = vpack.c.bf16 %v997, %v995
        %v1054 = vpack.c.bf16 %v998, %v996
        %v1055 = vpack.c.bf16 %v1001, %v999
        %v1056 = vpack.c.bf16 %v1002, %v1000
        %v1057 = vpack.c.bf16 %v1005, %v1003
        %v1058 = vpack.c.bf16 %v1006, %v1004
        %v1059 = vpack.c.bf16 %v1009, %v1007
        %v1060 = vpack.c.bf16 %v1010, %v1008
        %v1061 = vpack.c.bf16 %v1013, %v1011
        %v1062 = vpack.c.bf16 %v1014, %v1012
        %v1063 = vpack.c.bf16 %v1017, %v1015
        %v1064 = vpack.c.bf16 %v1018, %v1016
        %v1065 = vpack.c.bf16 %v1021, %v1019
        %v1066 = vpack.c.bf16 %v1022, %v1020
        %v1067 = vpack.c.bf16 %v1025, %v1023
        %v1068 = vpack.c.bf16 %v1026, %v1024
        %v1069 = vpack.c.bf16 %v1029, %v1027
        %v1070 = vpack.c.bf16 %v1030, %v1028
        %v1071 = vpack.c.bf16 %v1033, %v1031
        %v1072 = vpack.c.bf16 %v1034, %v1032
        %v1073 = vpack.c.bf16 %v1037, %v1035
        %v1074 = vpack.c.bf16 %v1038, %v1036
        %v1075 = vpack.c.bf16 %v1041, %v1039
        %v1076 = vpack.c.bf16 %v1042, %v1040
        %v1077 = vpack.c.bf16 %v1045, %v1043
        %v1078 = vpack.c.bf16 %v1046, %v1044
        %v1079 = vld [vmem:[#allocation5] sm:$0xff]
        %v1080 = vld [vmem:[#allocation5 + $0x8] sm:$0xff]
        %v1081 = vld [vmem:[#allocation5 + $0x10] sm:$0xff]
        %v1082 = vld [vmem:[#allocation5 + $0x18] sm:$0xff]
        %v1083 = vld [vmem:[#allocation5 + $0x20] sm:$0xff]
        %v1084 = vld [vmem:[#allocation5 + $0x28] sm:$0xff]
        %v1085 = vld [vmem:[#allocation5 + $0x30] sm:$0xff]
        %v1086 = vld [vmem:[#allocation5 + $0x38] sm:$0xff]
        %v1087 = vld [vmem:[#allocation5 + $0x40] sm:$0xff]
        %v1088 = vld [vmem:[#allocation5 + $0x48] sm:$0xff]
        %v1089 = vld [vmem:[#allocation5 + $0x50] sm:$0xff]
        %v1090 = vld [vmem:[#allocation5 + $0x58] sm:$0xff]
        %v1091 = vld [vmem:[#allocation5 + $0x60] sm:$0xff]
        %v1092 = vld [vmem:[#allocation5 + $0x68] sm:$0xff]
        %v1093 = vld [vmem:[#allocation5 + $0x70] sm:$0xff]
        %v1094 = vld [vmem:[#allocation5 + $0x78] sm:$0xff]
        %v1095 = vld [vmem:[#allocation5 + $0x80] sm:$0xff]
        %v1096 = vld [vmem:[#allocation5 + $0x88] sm:$0xff]
        %v1097 = vld [vmem:[#allocation5 + $0x90] sm:$0xff]
        %v1098 = vld [vmem:[#allocation5 + $0x98] sm:$0xff]
        %v1099 = vld [vmem:[#allocation5 + $0xa0] sm:$0xff]
        %v1100 = vld [vmem:[#allocation5 + $0xa8] sm:$0xff]
        %v1101 = vld [vmem:[#allocation5 + $0xb0] sm:$0xff]
        %v1102 = vld [vmem:[#allocation5 + $0xb8] sm:$0xff]
        %v1103 = vld [vmem:[#allocation5 + $0xc0] sm:$0xff]
        %v1104 = vld [vmem:[#allocation5 + $0xc8] sm:$0xff]
        %v1105 = vld [vmem:[#allocation5 + $0xd0] sm:$0xff]
        %v1106 = vld [vmem:[#allocation5 + $0xd8] sm:$0xff]
        %v1107 = vld [vmem:[#allocation5 + $0xe0] sm:$0xff]
        %v1108 = vld [vmem:[#allocation5 + $0xe8] sm:$0xff]
        %v1109 = vld [vmem:[#allocation5 + $0xf0] sm:$0xff]
        %v1110 = vld [vmem:[#allocation5 + $0xf8] sm:$0xff]
        %v1143 = vunpack.c.l.b16 %v1079
        %v1144 = vunpack.c.h.b16 %v1079
        %v1145 = vunpack.c.l.b16 %v1080
        %v1146 = vunpack.c.h.b16 %v1080
        %v1147 = vunpack.c.l.b16 %v1081
        %v1148 = vunpack.c.h.b16 %v1081
        %v1149 = vunpack.c.l.b16 %v1082
        %v1150 = vunpack.c.h.b16 %v1082
        %v1151 = vunpack.c.l.b16 %v1083
        %v1152 = vunpack.c.h.b16 %v1083
        %v1153 = vunpack.c.l.b16 %v1084
        %v1154 = vunpack.c.h.b16 %v1084
        %v1155 = vunpack.c.l.b16 %v1085
        %v1156 = vunpack.c.h.b16 %v1085
        %v1157 = vunpack.c.l.b16 %v1086
        %v1158 = vunpack.c.h.b16 %v1086
        %v1159 = vunpack.c.l.b16 %v1087
        %v1160 = vunpack.c.h.b16 %v1087
        %v1161 = vunpack.c.l.b16 %v1088
        %v1162 = vunpack.c.h.b16 %v1088
        %v1163 = vunpack.c.l.b16 %v1089
        %v1164 = vunpack.c.h.b16 %v1089
        %v1165 = vunpack.c.l.b16 %v1090
        %v1166 = vunpack.c.h.b16 %v1090
        %v1167 = vunpack.c.l.b16 %v1091
        %v1168 = vunpack.c.h.b16 %v1091
        %v1169 = vunpack.c.l.b16 %v1092
        %v1170 = vunpack.c.h.b16 %v1092
        %v1171 = vunpack.c.l.b16 %v1093
        %v1172 = vunpack.c.h.b16 %v1093
        %v1173 = vunpack.c.l.b16 %v1094
        %v1174 = vunpack.c.h.b16 %v1094
        %v1175 = vunpack.c.l.b16 %v1095
        %v1176 = vunpack.c.h.b16 %v1095
        %v1177 = vunpack.c.l.b16 %v1096
        %v1178 = vunpack.c.h.b16 %v1096
        %v1179 = vunpack.c.l.b16 %v1097
        %v1180 = vunpack.c.h.b16 %v1097
        %v1181 = vunpack.c.l.b16 %v1098
        %v1182 = vunpack.c.h.b16 %v1098
        %v1183 = vunpack.c.l.b16 %v1099
        %v1184 = vunpack.c.h.b16 %v1099
        %v1185 = vunpack.c.l.b16 %v1100
        %v1186 = vunpack.c.h.b16 %v1100
        %v1187 = vunpack.c.l.b16 %v1101
        %v1188 = vunpack.c.h.b16 %v1101
        %v1189 = vunpack.c.l.b16 %v1102
        %v1190 = vunpack.c.h.b16 %v1102
        %v1191 = vunpack.c.l.b16 %v1103
        %v1192 = vunpack.c.h.b16 %v1103
        %v1193 = vunpack.c.l.b16 %v1104
        %v1194 = vunpack.c.h.b16 %v1104
        %v1195 = vunpack.c.l.b16 %v1105
        %v1196 = vunpack.c.h.b16 %v1105
        %v1197 = vunpack.c.l.b16 %v1106
        %v1198 = vunpack.c.h.b16 %v1106
        %v1199 = vunpack.c.l.b16 %v1107
        %v1200 = vunpack.c.h.b16 %v1107
        %v1201 = vunpack.c.l.b16 %v1108
        %v1202 = vunpack.c.h.b16 %v1108
        %v1203 = vunpack.c.l.b16 %v1109
        %v1204 = vunpack.c.h.b16 %v1109
        %v1205 = vunpack.c.l.b16 %v1110
        %v1206 = vunpack.c.h.b16 %v1110
        %v1207 = vpack.c.b16 %v1145, %v1143
        %v1208 = vpack.c.b16 %v1146, %v1144
        %v1209 = vpack.c.b16 %v1149, %v1147
        %v1210 = vpack.c.b16 %v1150, %v1148
        %v1211 = vpack.c.b16 %v1153, %v1151
        %v1212 = vpack.c.b16 %v1154, %v1152
        %v1213 = vpack.c.b16 %v1157, %v1155
        %v1214 = vpack.c.b16 %v1158, %v1156
        %v1215 = vpack.c.b16 %v1161, %v1159
        %v1216 = vpack.c.b16 %v1162, %v1160
        %v1217 = vpack.c.b16 %v1165, %v1163
        %v1218 = vpack.c.b16 %v1166, %v1164
        %v1219 = vpack.c.b16 %v1169, %v1167
        %v1220 = vpack.c.b16 %v1170, %v1168
        %v1221 = vpack.c.b16 %v1173, %v1171
        %v1222 = vpack.c.b16 %v1174, %v1172
        %v1223 = vpack.c.b16 %v1177, %v1175
        %v1224 = vpack.c.b16 %v1178, %v1176
        %v1225 = vpack.c.b16 %v1181, %v1179
        %v1226 = vpack.c.b16 %v1182, %v1180
        %v1227 = vpack.c.b16 %v1185, %v1183
        %v1228 = vpack.c.b16 %v1186, %v1184
        %v1229 = vpack.c.b16 %v1189, %v1187
        %v1230 = vpack.c.b16 %v1190, %v1188
        %v1231 = vpack.c.b16 %v1193, %v1191
        %v1232 = vpack.c.b16 %v1194, %v1192
        %v1233 = vpack.c.b16 %v1197, %v1195
        %v1234 = vpack.c.b16 %v1198, %v1196
        %v1235 = vpack.c.b16 %v1201, %v1199
        %v1236 = vpack.c.b16 %v1202, %v1200
        %v1237 = vpack.c.b16 %v1205, %v1203
        %v1238 = vpack.c.b16 %v1206, %v1204
        %1271 = vmatprep.subr.bf16.mxu0 %v1208
        %1272 = vmatpush1.bf16.msra.mxu0 %v1207
        %1273 = vmatprep.subr.bf16.mxu0 %v1210
        %1274 = vmatpush1.bf16.msra.mxu0 %v1209
        %1275 = vmatprep.subr.bf16.mxu0 %v1212
        %1276 = vmatpush1.bf16.msra.mxu0 %v1211
        %1277 = vmatprep.subr.bf16.mxu0 %v1214
        %1278 = vmatpush1.bf16.msra.mxu0 %v1213
        %1279 = vmatprep.subr.bf16.mxu0 %v1216
        %1280 = vmatpush1.bf16.msra.mxu0 %v1215
        %1281 = vmatprep.subr.bf16.mxu0 %v1218
        %1282 = vmatpush1.bf16.msra.mxu0 %v1217
        %1283 = vmatprep.subr.bf16.mxu0 %v1220
        %1284 = vmatpush1.bf16.msra.mxu0 %v1219
        %1285 = vmatprep.subr.bf16.mxu0 %v1222
        %1286 = vmatpush1.bf16.msra.mxu0 %v1221
        %1287 = vmatprep.subr.bf16.mxu0 %v1224
        %1288 = vmatpush1.bf16.msra.mxu0 %v1223
        %1289 = vmatprep.subr.bf16.mxu0 %v1226
        %1290 = vmatpush1.bf16.msra.mxu0 %v1225
        %1291 = vmatprep.subr.bf16.mxu0 %v1228
        %1292 = vmatpush1.bf16.msra.mxu0 %v1227
        %1293 = vmatprep.subr.bf16.mxu0 %v1230
        %1294 = vmatpush1.bf16.msra.mxu0 %v1229
        %1295 = vmatprep.subr.bf16.mxu0 %v1232
        %1296 = vmatpush1.bf16.msra.mxu0 %v1231
        %1297 = vmatprep.subr.bf16.mxu0 %v1234
        %1298 = vmatpush1.bf16.msra.mxu0 %v1233
        %1299 = vmatprep.subr.bf16.mxu0 %v1236
        %1300 = vmatpush1.bf16.msra.mxu0 %v1235
        %1301 = vmatprep.subr.bf16.mxu0 %v1238
        %1302 = vmatpush1.bf16.msra.mxu0 %v1237
        %1303 = vmatprep.mubr.bf16.mxu0 %v1048
        %1304 = vmatmul.mubr.bf16.gmra.mrb[0].mxu0 %v1047
        %v1305 = vpop.f32.mrb[0].mxu0
        %v1306 = vadd.f32 0.0, %v1305
        %v1307 = vpop.f32.mrb[0].mxu0
        %v1308 = vadd.f32 0.0, %v1307
        %v1309 = vpop.f32.mrb[0].mxu0
        %v1310 = vadd.f32 0.0, %v1309
        %v1311 = vpop.f32.mrb[0].mxu0
        %v1312 = vadd.f32 0.0, %v1311
        %1313 = vmatprep.mubr.bf16.mxu0 %v1050
        %1314 = vmatmul.mubr.bf16.gmra.mrb[0].mxu0 %v1049
        %v1315 = vpop.f32.mrb[0].mxu0
        %v1316 = vadd.f32 0.0, %v1315
        %v1317 = vpop.f32.mrb[0].mxu0
        %v1318 = vadd.f32 0.0, %v1317
        %v1319 = vpop.f32.mrb[0].mxu0
        %v1320 = vadd.f32 0.0, %v1319
        %v1321 = vpop.f32.mrb[0].mxu0
        %v1322 = vadd.f32 0.0, %v1321
        %1323 = vmatprep.mubr.bf16.mxu0 %v1052
        %1324 = vmatmul.mubr.bf16.gmra.mrb[0].mxu0 %v1051
        %v1325 = vpop.f32.mrb[0].mxu0
        %v1326 = vadd.f32 0.0, %v1325
        %v1327 = vpop.f32.mrb[0].mxu0
        %v1328 = vadd.f32 0.0, %v1327
        %v1329 = vpop.f32.mrb[0].mxu0
        %v1330 = vadd.f32 0.0, %v1329
        %v1331 = vpop.f32.mrb[0].mxu0
        %v1332 = vadd.f32 0.0, %v1331
        %1333 = vmatprep.mubr.bf16.mxu0 %v1054
        %1334 = vmatmul.mubr.bf16.gmra.mrb[0].mxu0 %v1053
        %v1335 = vpop.f32.mrb[0].mxu0
        %v1336 = vadd.f32 0.0, %v1335
        %v1337 = vpop.f32.mrb[0].mxu0
        %v1338 = vadd.f32 0.0, %v1337
        %v1339 = vpop.f32.mrb[0].mxu0
        %v1340 = vadd.f32 0.0, %v1339
        %v1341 = vpop.f32.mrb[0].mxu0
        %v1342 = vadd.f32 0.0, %v1341
        %1343 = vmatprep.mubr.bf16.mxu0 %v1056
        %1344 = vmatmul.mubr.bf16.gmra.mrb[0].mxu0 %v1055
        %v1345 = vpop.f32.mrb[0].mxu0
        %v1346 = vadd.f32 0.0, %v1345
        %v1347 = vpop.f32.mrb[0].mxu0
        %v1348 = vadd.f32 0.0, %v1347
        %v1349 = vpop.f32.mrb[0].mxu0
        %v1350 = vadd.f32 0.0, %v1349
        %v1351 = vpop.f32.mrb[0].mxu0
        %v1352 = vadd.f32 0.0, %v1351
        %1353 = vmatprep.mubr.bf16.mxu0 %v1058
        %1354 = vmatmul.mubr.bf16.gmra.mrb[0].mxu0 %v1057
        %v1355 = vpop.f32.mrb[0].mxu0
        %v1356 = vadd.f32 0.0, %v1355
        %v1357 = vpop.f32.mrb[0].mxu0
        %v1358 = vadd.f32 0.0, %v1357
        %v1359 = vpop.f32.mrb[0].mxu0
        %v1360 = vadd.f32 0.0, %v1359
        %v1361 = vpop.f32.mrb[0].mxu0
        %v1362 = vadd.f32 0.0, %v1361
        %1363 = vmatprep.mubr.bf16.mxu0 %v1060
        %1364 = vmatmul.mubr.bf16.gmra.mrb[0].mxu0 %v1059
        %v1365 = vpop.f32.mrb[0].mxu0
        %v1366 = vadd.f32 0.0, %v1365
        %v1367 = vpop.f32.mrb[0].mxu0
        %v1368 = vadd.f32 0.0, %v1367
        %v1369 = vpop.f32.mrb[0].mxu0
        %v1370 = vadd.f32 0.0, %v1369
        %v1371 = vpop.f32.mrb[0].mxu0
        %v1372 = vadd.f32 0.0, %v1371
        %1373 = vmatprep.mubr.bf16.mxu0 %v1062
        %1374 = vmatmul.mubr.bf16.gmra.mrb[0].mxu0 %v1061
        %v1375 = vpop.f32.mrb[0].mxu0
        %v1376 = vadd.f32 0.0, %v1375
        %v1377 = vpop.f32.mrb[0].mxu0
        %v1378 = vadd.f32 0.0, %v1377
        %v1379 = vpop.f32.mrb[0].mxu0
        %v1380 = vadd.f32 0.0, %v1379
        %v1381 = vpop.f32.mrb[0].mxu0
        %v1382 = vadd.f32 0.0, %v1381
        %1383 = vmatprep.mubr.bf16.mxu0 %v1064
        %1384 = vmatmul.mubr.bf16.gmra.mrb[0].mxu0 %v1063
        %v1385 = vpop.f32.mrb[0].mxu0
        %v1386 = vadd.f32 0.0, %v1385
        %v1387 = vpop.f32.mrb[0].mxu0
        %v1388 = vadd.f32 0.0, %v1387
        %v1389 = vpop.f32.mrb[0].mxu0
        %v1390 = vadd.f32 0.0, %v1389
        %v1391 = vpop.f32.mrb[0].mxu0
        %v1392 = vadd.f32 0.0, %v1391
        %1393 = vmatprep.mubr.bf16.mxu0 %v1066
        %1394 = vmatmul.mubr.bf16.gmra.mrb[0].mxu0 %v1065
        %v1395 = vpop.f32.mrb[0].mxu0
        %v1396 = vadd.f32 0.0, %v1395
        %v1397 = vpop.f32.mrb[0].mxu0
        %v1398 = vadd.f32 0.0, %v1397
        %v1399 = vpop.f32.mrb[0].mxu0
        %v1400 = vadd.f32 0.0, %v1399
        %v1401 = vpop.f32.mrb[0].mxu0
        %v1402 = vadd.f32 0.0, %v1401
        %1403 = vmatprep.mubr.bf16.mxu0 %v1068
        %1404 = vmatmul.mubr.bf16.gmra.mrb[0].mxu0 %v1067
        %v1405 = vpop.f32.mrb[0].mxu0
        %v1406 = vadd.f32 0.0, %v1405
        %v1407 = vpop.f32.mrb[0].mxu0
        %v1408 = vadd.f32 0.0, %v1407
        %v1409 = vpop.f32.mrb[0].mxu0
        %v1410 = vadd.f32 0.0, %v1409
        %v1411 = vpop.f32.mrb[0].mxu0
        %v1412 = vadd.f32 0.0, %v1411
        %1413 = vmatprep.mubr.bf16.mxu0 %v1070
        %1414 = vmatmul.mubr.bf16.gmra.mrb[0].mxu0 %v1069
        %v1415 = vpop.f32.mrb[0].mxu0
        %v1416 = vadd.f32 0.0, %v1415
        %v1417 = vpop.f32.mrb[0].mxu0
        %v1418 = vadd.f32 0.0, %v1417
        %v1419 = vpop.f32.mrb[0].mxu0
        %v1420 = vadd.f32 0.0, %v1419
        %v1421 = vpop.f32.mrb[0].mxu0
        %v1422 = vadd.f32 0.0, %v1421
        %1423 = vmatprep.mubr.bf16.mxu0 %v1072
        %1424 = vmatmul.mubr.bf16.gmra.mrb[0].mxu0 %v1071
        %v1425 = vpop.f32.mrb[0].mxu0
        %v1426 = vadd.f32 0.0, %v1425
        %v1427 = vpop.f32.mrb[0].mxu0
        %v1428 = vadd.f32 0.0, %v1427
        %v1429 = vpop.f32.mrb[0].mxu0
        %v1430 = vadd.f32 0.0, %v1429
        %v1431 = vpop.f32.mrb[0].mxu0
        %v1432 = vadd.f32 0.0, %v1431
        %1433 = vmatprep.mubr.bf16.mxu0 %v1074
        %1434 = vmatmul.mubr.bf16.gmra.mrb[0].mxu0 %v1073
        %v1435 = vpop.f32.mrb[0].mxu0
        %v1436 = vadd.f32 0.0, %v1435
        %v1437 = vpop.f32.mrb[0].mxu0
        %v1438 = vadd.f32 0.0, %v1437
        %v1439 = vpop.f32.mrb[0].mxu0
        %v1440 = vadd.f32 0.0, %v1439
        %v1441 = vpop.f32.mrb[0].mxu0
        %v1442 = vadd.f32 0.0, %v1441
        %1443 = vmatprep.mubr.bf16.mxu0 %v1076
        %1444 = vmatmul.mubr.bf16.gmra.mrb[0].mxu0 %v1075
        %v1445 = vpop.f32.mrb[0].mxu0
        %v1446 = vadd.f32 0.0, %v1445
        %v1447 = vpop.f32.mrb[0].mxu0
        %v1448 = vadd.f32 0.0, %v1447
        %v1449 = vpop.f32.mrb[0].mxu0
        %v1450 = vadd.f32 0.0, %v1449
        %v1451 = vpop.f32.mrb[0].mxu0
        %v1452 = vadd.f32 0.0, %v1451
        %1453 = vmatprep.mubr.bf16.mxu0 %v1078
        %1454 = vmatmul.mubr.bf16.gmra.mrb[0].mxu0 %v1077
        %v1455 = vpop.f32.mrb[0].mxu0
        %v1456 = vadd.f32 0.0, %v1455
        %v1457 = vpop.f32.mrb[0].mxu0
        %v1458 = vadd.f32 0.0, %v1457
        %v1459 = vpop.f32.mrb[0].mxu0
        %v1460 = vadd.f32 0.0, %v1459
        %v1461 = vpop.f32.mrb[0].mxu0
        %v1462 = vadd.f32 0.0, %v1461
        %1463 = vdwg.mxu0
        %v1464 = vpack.c.bf16 %v1310, %v1306
        %v1465 = vpack.c.bf16 %v1312, %v1308
        %v1466 = vpack.c.bf16 %v1320, %v1316
        %v1467 = vpack.c.bf16 %v1322, %v1318
        %v1468 = vpack.c.bf16 %v1330, %v1326
        %v1469 = vpack.c.bf16 %v1332, %v1328
        %v1470 = vpack.c.bf16 %v1340, %v1336
        %v1471 = vpack.c.bf16 %v1342, %v1338
        %v1472 = vpack.c.bf16 %v1350, %v1346
        %v1473 = vpack.c.bf16 %v1352, %v1348
        %v1474 = vpack.c.bf16 %v1360, %v1356
        %v1475 = vpack.c.bf16 %v1362, %v1358
        %v1476 = vpack.c.bf16 %v1370, %v1366
        %v1477 = vpack.c.bf16 %v1372, %v1368
        %v1478 = vpack.c.bf16 %v1380, %v1376
        %v1479 = vpack.c.bf16 %v1382, %v1378
        %v1480 = vpack.c.bf16 %v1390, %v1386
        %v1481 = vpack.c.bf16 %v1392, %v1388
        %v1482 = vpack.c.bf16 %v1400, %v1396
        %v1483 = vpack.c.bf16 %v1402, %v1398
        %v1484 = vpack.c.bf16 %v1410, %v1406
        %v1485 = vpack.c.bf16 %v1412, %v1408
        %v1486 = vpack.c.bf16 %v1420, %v1416
        %v1487 = vpack.c.bf16 %v1422, %v1418
        %v1488 = vpack.c.bf16 %v1430, %v1426
        %v1489 = vpack.c.bf16 %v1432, %v1428
        %v1490 = vpack.c.bf16 %v1440, %v1436
        %v1491 = vpack.c.bf16 %v1442, %v1438
        %v1492 = vpack.c.bf16 %v1450, %v1446
        %v1493 = vpack.c.bf16 %v1452, %v1448
        %v1494 = vpack.c.bf16 %v1460, %v1456
        %v1495 = vpack.c.bf16 %v1462, %v1458
        %v1496 = vld [vmem:[%s5] sm:$0x3]
        %v1498 = vlaneseq
        %v1499 = vshrl.u32 %v1498, 7
        %v1500 = vsub.s32 0, %v1499
        %v1501 = vrot.slane %v1496, %v1500
        %v1502 = vlaneseq
        %v1503 = vshrl.u32 %v1502, 7
        %v1504 = vsub.s32 1, %v1503
        %v1505 = vrot.slane %v1496, %v1504
        %1508 = vmatprep.subr.bf16.mxu0 %v1465
        %1509 = vmatpush1.bf16.msra.mxu0 %v1464
        %1510 = vmatprep.subr.bf16.mxu0 %v1467
        %1511 = vmatpush1.bf16.msra.mxu0 %v1466
        %1512 = vmatprep.subr.bf16.mxu0 %v1469
        %1513 = vmatpush1.bf16.msra.mxu0 %v1468
        %1514 = vmatprep.subr.bf16.mxu0 %v1471
        %1515 = vmatpush1.bf16.msra.mxu0 %v1470
        %1516 = vmatprep.subr.bf16.mxu0 %v1473
        %1517 = vmatpush1.bf16.msra.mxu0 %v1472
        %1518 = vmatprep.subr.bf16.mxu0 %v1475
        %1519 = vmatpush1.bf16.msra.mxu0 %v1474
        %1520 = vmatprep.subr.bf16.mxu0 %v1477
        %1521 = vmatpush1.bf16.msra.mxu0 %v1476
        %1522 = vmatprep.subr.bf16.mxu0 %v1479
        %1523 = vmatpush1.bf16.msra.mxu0 %v1478
        %1524 = vmatprep.subr.bf16.mxu0 %v1481
        %1525 = vmatpush1.bf16.msra.mxu0 %v1480
        %1526 = vmatprep.subr.bf16.mxu0 %v1483
        %1527 = vmatpush1.bf16.msra.mxu0 %v1482
        %1528 = vmatprep.subr.bf16.mxu0 %v1485
        %1529 = vmatpush1.bf16.msra.mxu0 %v1484
        %1530 = vmatprep.subr.bf16.mxu0 %v1487
        %1531 = vmatpush1.bf16.msra.mxu0 %v1486
        %1532 = vmatprep.subr.bf16.mxu0 %v1489
        %1533 = vmatpush1.bf16.msra.mxu0 %v1488
        %1534 = vmatprep.subr.bf16.mxu0 %v1491
        %1535 = vmatpush1.bf16.msra.mxu0 %v1490
        %1536 = vmatprep.subr.bf16.mxu0 %v1493
        %1537 = vmatpush1.bf16.msra.mxu0 %v1492
        %1538 = vmatprep.subr.bf16.mxu0 %v1495
        %1539 = vmatpush1.bf16.msra.mxu0 %v1494
        %1540 = vmatprep.mubr.bf16.mxu0 %v567
        %1541 = vmatmul.mubr.bf16.gmra.mrb[0].mxu0 %v566
        %v1542 = vpop.f32.mrb[0].mxu0
        %v1543 = vadd.f32 %v1501, %v1542
        %v1544 = vpop.f32.mrb[0].mxu0
        %v1545 = vadd.f32 %v1505, %v1544
        %v1546 = vpop.f32.mrb[0].mxu0
        %v1547 = vadd.f32 %v1501, %v1546
        %v1548 = vpop.f32.mrb[0].mxu0
        %v1549 = vadd.f32 %v1505, %v1548
        %1550 = vmatprep.mubr.bf16.mxu0 %v569
        %1551 = vmatmul.mubr.bf16.gmra.mrb[0].mxu0 %v568
        %v1552 = vpop.f32.mrb[0].mxu0
        %v1553 = vadd.f32 %v1501, %v1552
        %v1554 = vpop.f32.mrb[0].mxu0
        %v1555 = vadd.f32 %v1505, %v1554
        %v1556 = vpop.f32.mrb[0].mxu0
        %v1557 = vadd.f32 %v1501, %v1556
        %v1558 = vpop.f32.mrb[0].mxu0
        %v1559 = vadd.f32 %v1505, %v1558
        %1560 = vmatprep.mubr.bf16.mxu0 %v571
        %1561 = vmatmul.mubr.bf16.gmra.mrb[0].mxu0 %v570
        %v1562 = vpop.f32.mrb[0].mxu0
        %v1563 = vadd.f32 %v1501, %v1562
        %v1564 = vpop.f32.mrb[0].mxu0
        %v1565 = vadd.f32 %v1505, %v1564
        %v1566 = vpop.f32.mrb[0].mxu0
        %v1567 = vadd.f32 %v1501, %v1566
        %v1568 = vpop.f32.mrb[0].mxu0
        %v1569 = vadd.f32 %v1505, %v1568
        %1570 = vmatprep.mubr.bf16.mxu0 %v573
        %1571 = vmatmul.mubr.bf16.gmra.mrb[0].mxu0 %v572
        %v1572 = vpop.f32.mrb[0].mxu0
        %v1573 = vadd.f32 %v1501, %v1572
        %v1574 = vpop.f32.mrb[0].mxu0
        %v1575 = vadd.f32 %v1505, %v1574
        %v1576 = vpop.f32.mrb[0].mxu0
        %v1577 = vadd.f32 %v1501, %v1576
        %v1578 = vpop.f32.mrb[0].mxu0
        %v1579 = vadd.f32 %v1505, %v1578
        %1580 = vmatprep.mubr.bf16.mxu0 %v575
        %1581 = vmatmul.mubr.bf16.gmra.mrb[0].mxu0 %v574
        %v1582 = vpop.f32.mrb[0].mxu0
        %v1583 = vadd.f32 %v1501, %v1582
        %v1584 = vpop.f32.mrb[0].mxu0
        %v1585 = vadd.f32 %v1505, %v1584
        %v1586 = vpop.f32.mrb[0].mxu0
        %v1587 = vadd.f32 %v1501, %v1586
        %v1588 = vpop.f32.mrb[0].mxu0
        %v1589 = vadd.f32 %v1505, %v1588
        %1590 = vmatprep.mubr.bf16.mxu0 %v577
        %1591 = vmatmul.mubr.bf16.gmra.mrb[0].mxu0 %v576
        %v1592 = vpop.f32.mrb[0].mxu0
        %v1593 = vadd.f32 %v1501, %v1592
        %v1594 = vpop.f32.mrb[0].mxu0
        %v1595 = vadd.f32 %v1505, %v1594
        %v1596 = vpop.f32.mrb[0].mxu0
        %v1597 = vadd.f32 %v1501, %v1596
        %v1598 = vpop.f32.mrb[0].mxu0
        %v1599 = vadd.f32 %v1505, %v1598
        %1600 = vmatprep.mubr.bf16.mxu0 %v579
        %1601 = vmatmul.mubr.bf16.gmra.mrb[0].mxu0 %v578
        %v1602 = vpop.f32.mrb[0].mxu0
        %v1603 = vadd.f32 %v1501, %v1602
        %v1604 = vpop.f32.mrb[0].mxu0
        %v1605 = vadd.f32 %v1505, %v1604
        %v1606 = vpop.f32.mrb[0].mxu0
        %v1607 = vadd.f32 %v1501, %v1606
        %v1608 = vpop.f32.mrb[0].mxu0
        %v1609 = vadd.f32 %v1505, %v1608
        %1610 = vmatprep.mubr.bf16.mxu0 %v581
        %1611 = vmatmul.mubr.bf16.gmra.mrb[0].mxu0 %v580
        %v1612 = vpop.f32.mrb[0].mxu0
        %v1613 = vadd.f32 %v1501, %v1612
        %v1614 = vpop.f32.mrb[0].mxu0
        %v1615 = vadd.f32 %v1505, %v1614
        %v1616 = vpop.f32.mrb[0].mxu0
        %v1617 = vadd.f32 %v1501, %v1616
        %v1618 = vpop.f32.mrb[0].mxu0
        %v1619 = vadd.f32 %v1505, %v1618
        %1620 = vmatprep.mubr.bf16.mxu0 %v583
        %1621 = vmatmul.mubr.bf16.gmra.mrb[0].mxu0 %v582
        %v1622 = vpop.f32.mrb[0].mxu0
        %v1623 = vadd.f32 %v1501, %v1622
        %v1624 = vpop.f32.mrb[0].mxu0
        %v1625 = vadd.f32 %v1505, %v1624
        %v1626 = vpop.f32.mrb[0].mxu0
        %v1627 = vadd.f32 %v1501, %v1626
        %v1628 = vpop.f32.mrb[0].mxu0
        %v1629 = vadd.f32 %v1505, %v1628
        %1630 = vmatprep.mubr.bf16.mxu0 %v585
        %1631 = vmatmul.mubr.bf16.gmra.mrb[0].mxu0 %v584
        %v1632 = vpop.f32.mrb[0].mxu0
        %v1633 = vadd.f32 %v1501, %v1632
        %v1634 = vpop.f32.mrb[0].mxu0
        %v1635 = vadd.f32 %v1505, %v1634
        %v1636 = vpop.f32.mrb[0].mxu0
        %v1637 = vadd.f32 %v1501, %v1636
        %v1638 = vpop.f32.mrb[0].mxu0
        %v1639 = vadd.f32 %v1505, %v1638
        %1640 = vmatprep.mubr.bf16.mxu0 %v587
        %1641 = vmatmul.mubr.bf16.gmra.mrb[0].mxu0 %v586
        %v1642 = vpop.f32.mrb[0].mxu0
        %v1643 = vadd.f32 %v1501, %v1642
        %v1644 = vpop.f32.mrb[0].mxu0
        %v1645 = vadd.f32 %v1505, %v1644
        %v1646 = vpop.f32.mrb[0].mxu0
        %v1647 = vadd.f32 %v1501, %v1646
        %v1648 = vpop.f32.mrb[0].mxu0
        %v1649 = vadd.f32 %v1505, %v1648
        %1650 = vmatprep.mubr.bf16.mxu0 %v589
        %1651 = vmatmul.mubr.bf16.gmra.mrb[0].mxu0 %v588
        %v1652 = vpop.f32.mrb[0].mxu0
        %v1653 = vadd.f32 %v1501, %v1652
        %v1654 = vpop.f32.mrb[0].mxu0
        %v1655 = vadd.f32 %v1505, %v1654
        %v1656 = vpop.f32.mrb[0].mxu0
        %v1657 = vadd.f32 %v1501, %v1656
        %v1658 = vpop.f32.mrb[0].mxu0
        %v1659 = vadd.f32 %v1505, %v1658
        %1660 = vmatprep.mubr.bf16.mxu0 %v591
        %1661 = vmatmul.mubr.bf16.gmra.mrb[0].mxu0 %v590
        %v1662 = vpop.f32.mrb[0].mxu0
        %v1663 = vadd.f32 %v1501, %v1662
        %v1664 = vpop.f32.mrb[0].mxu0
        %v1665 = vadd.f32 %v1505, %v1664
        %v1666 = vpop.f32.mrb[0].mxu0
        %v1667 = vadd.f32 %v1501, %v1666
        %v1668 = vpop.f32.mrb[0].mxu0
        %v1669 = vadd.f32 %v1505, %v1668
        %1670 = vmatprep.mubr.bf16.mxu0 %v593
        %1671 = vmatmul.mubr.bf16.gmra.mrb[0].mxu0 %v592
        %v1672 = vpop.f32.mrb[0].mxu0
        %v1673 = vadd.f32 %v1501, %v1672
        %v1674 = vpop.f32.mrb[0].mxu0
        %v1675 = vadd.f32 %v1505, %v1674
        %v1676 = vpop.f32.mrb[0].mxu0
        %v1677 = vadd.f32 %v1501, %v1676
        %v1678 = vpop.f32.mrb[0].mxu0
        %v1679 = vadd.f32 %v1505, %v1678
        %1680 = vmatprep.mubr.bf16.mxu0 %v595
        %1681 = vmatmul.mubr.bf16.gmra.mrb[0].mxu0 %v594
        %v1682 = vpop.f32.mrb[0].mxu0
        %v1683 = vadd.f32 %v1501, %v1682
        %v1684 = vpop.f32.mrb[0].mxu0
        %v1685 = vadd.f32 %v1505, %v1684
        %v1686 = vpop.f32.mrb[0].mxu0
        %v1687 = vadd.f32 %v1501, %v1686
        %v1688 = vpop.f32.mrb[0].mxu0
        %v1689 = vadd.f32 %v1505, %v1688
        %1690 = vmatprep.mubr.bf16.mxu0 %v597
        %1691 = vmatmul.mubr.bf16.gmra.mrb[0].mxu0 %v596
        %v1692 = vpop.f32.mrb[0].mxu0
        %v1693 = vadd.f32 %v1501, %v1692
        %v1694 = vpop.f32.mrb[0].mxu0
        %v1695 = vadd.f32 %v1505, %v1694
        %v1696 = vpop.f32.mrb[0].mxu0
        %v1697 = vadd.f32 %v1501, %v1696
        %v1698 = vpop.f32.mrb[0].mxu0
        %v1699 = vadd.f32 %v1505, %v1698
        %1700 = vdwg.mxu0
        %v1701 = vmax.f32 %v1543, 0.0
        %v1702 = vmax.f32 %v1545, 0.0
        %v1703 = vmax.f32 %v1547, 0.0
        %v1704 = vmax.f32 %v1549, 0.0
        %v1705 = vmax.f32 %v1553, 0.0
        %v1706 = vmax.f32 %v1555, 0.0
        %v1707 = vmax.f32 %v1557, 0.0
        %v1708 = vmax.f32 %v1559, 0.0
        %v1709 = vmax.f32 %v1563, 0.0
        %v1710 = vmax.f32 %v1565, 0.0
        %v1711 = vmax.f32 %v1567, 0.0
        %v1712 = vmax.f32 %v1569, 0.0
        %v1713 = vmax.f32 %v1573, 0.0
        %v1714 = vmax.f32 %v1575, 0.0
        %v1715 = vmax.f32 %v1577, 0.0
        %v1716 = vmax.f32 %v1579, 0.0
        %v1717 = vmax.f32 %v1583, 0.0
        %v1718 = vmax.f32 %v1585, 0.0
        %v1719 = vmax.f32 %v1587, 0.0
        %v1720 = vmax.f32 %v1589, 0.0
        %v1721 = vmax.f32 %v1593, 0.0
        %v1722 = vmax.f32 %v1595, 0.0
        %v1723 = vmax.f32 %v1597, 0.0
        %v1724 = vmax.f32 %v1599, 0.0
        %v1725 = vmax.f32 %v1603, 0.0
        %v1726 = vmax.f32 %v1605, 0.0
        %v1727 = vmax.f32 %v1607, 0.0
        %v1728 = vmax.f32 %v1609, 0.0
        %v1729 = vmax.f32 %v1613, 0.0
        %v1730 = vmax.f32 %v1615, 0.0
        %v1731 = vmax.f32 %v1617, 0.0
        %v1732 = vmax.f32 %v1619, 0.0
        %v1733 = vmax.f32 %v1623, 0.0
        %v1734 = vmax.f32 %v1625, 0.0
        %v1735 = vmax.f32 %v1627, 0.0
        %v1736 = vmax.f32 %v1629, 0.0
        %v1737 = vmax.f32 %v1633, 0.0
        %v1738 = vmax.f32 %v1635, 0.0
        %v1739 = vmax.f32 %v1637, 0.0
        %v1740 = vmax.f32 %v1639, 0.0
        %v1741 = vmax.f32 %v1643, 0.0
        %v1742 = vmax.f32 %v1645, 0.0
        %v1743 = vmax.f32 %v1647, 0.0
        %v1744 = vmax.f32 %v1649, 0.0
        %v1745 = vmax.f32 %v1653, 0.0
        %v1746 = vmax.f32 %v1655, 0.0
        %v1747 = vmax.f32 %v1657, 0.0
        %v1748 = vmax.f32 %v1659, 0.0
        %v1749 = vmax.f32 %v1663, 0.0
        %v1750 = vmax.f32 %v1665, 0.0
        %v1751 = vmax.f32 %v1667, 0.0
        %v1752 = vmax.f32 %v1669, 0.0
        %v1753 = vmax.f32 %v1673, 0.0
        %v1754 = vmax.f32 %v1675, 0.0
        %v1755 = vmax.f32 %v1677, 0.0
        %v1756 = vmax.f32 %v1679, 0.0
        %v1757 = vmax.f32 %v1683, 0.0
        %v1758 = vmax.f32 %v1685, 0.0
        %v1759 = vmax.f32 %v1687, 0.0
        %v1760 = vmax.f32 %v1689, 0.0
        %v1761 = vmax.f32 %v1693, 0.0
        %v1762 = vmax.f32 %v1695, 0.0
        %v1763 = vmax.f32 %v1697, 0.0
        %v1764 = vmax.f32 %v1699, 0.0
        %v1765 = vld [vmem:[%s392] sm:$0xff]
        %v1766 = vld [vmem:[%s392 + $0x8] sm:$0xff]
        %v1767 = vld [vmem:[%s392 + $0x10] sm:$0xff]
        %v1768 = vld [vmem:[%s392 + $0x18] sm:$0xff]
        %v1769 = vld [vmem:[%s392 + $0x20] sm:$0xff]
        %v1770 = vld [vmem:[%s392 + $0x28] sm:$0xff]
        %v1771 = vld [vmem:[%s392 + $0x30] sm:$0xff]
        %v1772 = vld [vmem:[%s392 + $0x38] sm:$0xff]
        %v1773 = vld [vmem:[%s392 + $0x40] sm:$0xff]
        %v1774 = vld [vmem:[%s392 + $0x48] sm:$0xff]
        %v1775 = vld [vmem:[%s392 + $0x50] sm:$0xff]
        %v1776 = vld [vmem:[%s392 + $0x58] sm:$0xff]
        %v1777 = vld [vmem:[%s392 + $0x60] sm:$0xff]
        %v1778 = vld [vmem:[%s392 + $0x68] sm:$0xff]
        %v1779 = vld [vmem:[%s392 + $0x70] sm:$0xff]
        %v1780 = vld [vmem:[%s392 + $0x78] sm:$0xff]
        %v1781 = vld [vmem:[%s392 + $0x80] sm:$0xff]
        %v1782 = vld [vmem:[%s392 + $0x88] sm:$0xff]
        %v1783 = vld [vmem:[%s392 + $0x90] sm:$0xff]
        %v1784 = vld [vmem:[%s392 + $0x98] sm:$0xff]
        %v1785 = vld [vmem:[%s392 + $0xa0] sm:$0xff]
        %v1786 = vld [vmem:[%s392 + $0xa8] sm:$0xff]
        %v1787 = vld [vmem:[%s392 + $0xb0] sm:$0xff]
        %v1788 = vld [vmem:[%s392 + $0xb8] sm:$0xff]
        %v1789 = vld [vmem:[%s392 + $0xc0] sm:$0xff]
        %v1790 = vld [vmem:[%s392 + $0xc8] sm:$0xff]
        %v1791 = vld [vmem:[%s392 + $0xd0] sm:$0xff]
        %v1792 = vld [vmem:[%s392 + $0xd8] sm:$0xff]
        %v1793 = vld [vmem:[%s392 + $0xe0] sm:$0xff]
        %v1794 = vld [vmem:[%s392 + $0xe8] sm:$0xff]
        %v1795 = vld [vmem:[%s392 + $0xf0] sm:$0xff]
        %v1796 = vld [vmem:[%s392 + $0xf8] sm:$0xff]
        %1798 = vset.pattern.permute.xlu0 0
        %1799 = vperm.xlu0 %1798, %v1765
        %v1800 = vpop.permute.xlu0 %1799
        %1803 = vset.pattern.permute.xlu0 0
        %1804 = vperm.xlu0 %1803, %v1766
        %v1805 = vpop.permute.xlu0 %1804
        %1808 = vset.pattern.permute.xlu0 0
        %1809 = vperm.xlu0 %1808, %v1767
        %v1810 = vpop.permute.xlu0 %1809
        %1813 = vset.pattern.permute.xlu0 0
        %1814 = vperm.xlu0 %1813, %v1768
        %v1815 = vpop.permute.xlu0 %1814
        %1818 = vset.pattern.permute.xlu0 0
        %1819 = vperm.xlu0 %1818, %v1769
        %v1820 = vpop.permute.xlu0 %1819
        %1823 = vset.pattern.permute.xlu0 0
        %1824 = vperm.xlu0 %1823, %v1770
        %v1825 = vpop.permute.xlu0 %1824
        %1828 = vset.pattern.permute.xlu0 0
        %1829 = vperm.xlu0 %1828, %v1771
        %v1830 = vpop.permute.xlu0 %1829
        %1833 = vset.pattern.permute.xlu0 0
        %1834 = vperm.xlu0 %1833, %v1772
        %v1835 = vpop.permute.xlu0 %1834
        %1838 = vset.pattern.permute.xlu0 0
        %1839 = vperm.xlu0 %1838, %v1773
        %v1840 = vpop.permute.xlu0 %1839
        %1843 = vset.pattern.permute.xlu0 0
        %1844 = vperm.xlu0 %1843, %v1774
        %v1845 = vpop.permute.xlu0 %1844
        %1848 = vset.pattern.permute.xlu0 0
        %1849 = vperm.xlu0 %1848, %v1775
        %v1850 = vpop.permute.xlu0 %1849
        %1853 = vset.pattern.permute.xlu0 0
        %1854 = vperm.xlu0 %1853, %v1776
        %v1855 = vpop.permute.xlu0 %1854
        %1858 = vset.pattern.permute.xlu0 0
        %1859 = vperm.xlu0 %1858, %v1777
        %v1860 = vpop.permute.xlu0 %1859
        %1863 = vset.pattern.permute.xlu0 0
        %1864 = vperm.xlu0 %1863, %v1778
        %v1865 = vpop.permute.xlu0 %1864
        %1868 = vset.pattern.permute.xlu0 0
        %1869 = vperm.xlu0 %1868, %v1779
        %v1870 = vpop.permute.xlu0 %1869
        %1873 = vset.pattern.permute.xlu0 0
        %1874 = vperm.xlu0 %1873, %v1780
        %v1875 = vpop.permute.xlu0 %1874
        %1878 = vset.pattern.permute.xlu0 0
        %1879 = vperm.xlu0 %1878, %v1781
        %v1880 = vpop.permute.xlu0 %1879
        %1883 = vset.pattern.permute.xlu0 0
        %1884 = vperm.xlu0 %1883, %v1782
        %v1885 = vpop.permute.xlu0 %1884
        %1888 = vset.pattern.permute.xlu0 0
        %1889 = vperm.xlu0 %1888, %v1783
        %v1890 = vpop.permute.xlu0 %1889
        %1893 = vset.pattern.permute.xlu0 0
        %1894 = vperm.xlu0 %1893, %v1784
        %v1895 = vpop.permute.xlu0 %1894
        %1898 = vset.pattern.permute.xlu0 0
        %1899 = vperm.xlu0 %1898, %v1785
        %v1900 = vpop.permute.xlu0 %1899
        %1903 = vset.pattern.permute.xlu0 0
        %1904 = vperm.xlu0 %1903, %v1786
        %v1905 = vpop.permute.xlu0 %1904
        %1908 = vset.pattern.permute.xlu0 0
        %1909 = vperm.xlu0 %1908, %v1787
        %v1910 = vpop.permute.xlu0 %1909
        %1913 = vset.pattern.permute.xlu0 0
        %1914 = vperm.xlu0 %1913, %v1788
        %v1915 = vpop.permute.xlu0 %1914
        %1918 = vset.pattern.permute.xlu0 0
        %1919 = vperm.xlu0 %1918, %v1789
        %v1920 = vpop.permute.xlu0 %1919
        %1923 = vset.pattern.permute.xlu0 0
        %1924 = vperm.xlu0 %1923, %v1790
        %v1925 = vpop.permute.xlu0 %1924
        %1928 = vset.pattern.permute.xlu0 0
        %1929 = vperm.xlu0 %1928, %v1791
        %v1930 = vpop.permute.xlu0 %1929
        %1933 = vset.pattern.permute.xlu0 0
        %1934 = vperm.xlu0 %1933, %v1792
        %v1935 = vpop.permute.xlu0 %1934
        %1938 = vset.pattern.permute.xlu0 0
        %1939 = vperm.xlu0 %1938, %v1793
        %v1940 = vpop.permute.xlu0 %1939
        %1943 = vset.pattern.permute.xlu0 0
        %1944 = vperm.xlu0 %1943, %v1794
        %v1945 = vpop.permute.xlu0 %1944
        %1948 = vset.pattern.permute.xlu0 0
        %1949 = vperm.xlu0 %1948, %v1795
        %v1950 = vpop.permute.xlu0 %1949
        %1953 = vset.pattern.permute.xlu0 0
        %1954 = vperm.xlu0 %1953, %v1796
        %v1955 = vpop.permute.xlu0 %1954
        %v1957 = vadd.f32 %v1701, %v1800
        %v1958 = vadd.f32 %v1702, %v1800
        %v1959 = vadd.f32 %v1703, %v1805
        %v1960 = vadd.f32 %v1704, %v1805
        %v1961 = vadd.f32 %v1705, %v1810
        %v1962 = vadd.f32 %v1706, %v1810
        %v1963 = vadd.f32 %v1707, %v1815
        %v1964 = vadd.f32 %v1708, %v1815
        %v1965 = vadd.f32 %v1709, %v1820
        %v1966 = vadd.f32 %v1710, %v1820
        %v1967 = vadd.f32 %v1711, %v1825
        %v1968 = vadd.f32 %v1712, %v1825
        %v1969 = vadd.f32 %v1713, %v1830
        %v1970 = vadd.f32 %v1714, %v1830
        %v1971 = vadd.f32 %v1715, %v1835
        %v1972 = vadd.f32 %v1716, %v1835
        %v1973 = vadd.f32 %v1717, %v1840
        %v1974 = vadd.f32 %v1718, %v1840
        %v1975 = vadd.f32 %v1719, %v1845
        %v1976 = vadd.f32 %v1720, %v1845
        %v1977 = vadd.f32 %v1721, %v1850
        %v1978 = vadd.f32 %v1722, %v1850
        %v1979 = vadd.f32 %v1723, %v1855
        %v1980 = vadd.f32 %v1724, %v1855
        %v1981 = vadd.f32 %v1725, %v1860
        %v1982 = vadd.f32 %v1726, %v1860
        %v1983 = vadd.f32 %v1727, %v1865
        %v1984 = vadd.f32 %v1728, %v1865
        %v1985 = vadd.f32 %v1729, %v1870
        %v1986 = vadd.f32 %v1730, %v1870
        %v1987 = vadd.f32 %v1731, %v1875
        %v1988 = vadd.f32 %v1732, %v1875
        %v1989 = vadd.f32 %v1733, %v1880
        %v1990 = vadd.f32 %v1734, %v1880
        %v1991 = vadd.f32 %v1735, %v1885
        %v1992 = vadd.f32 %v1736, %v1885
        %v1993 = vadd.f32 %v1737, %v1890
        %v1994 = vadd.f32 %v1738, %v1890
        %v1995 = vadd.f32 %v1739, %v1895
        %v1996 = vadd.f32 %v1740, %v1895
        %v1997 = vadd.f32 %v1741, %v1900
        %v1998 = vadd.f32 %v1742, %v1900
        %v1999 = vadd.f32 %v1743, %v1905
        %v2000 = vadd.f32 %v1744, %v1905
        %v2001 = vadd.f32 %v1745, %v1910
        %v2002 = vadd.f32 %v1746, %v1910
        %v2003 = vadd.f32 %v1747, %v1915
        %v2004 = vadd.f32 %v1748, %v1915
        %v2005 = vadd.f32 %v1749, %v1920
        %v2006 = vadd.f32 %v1750, %v1920
        %v2007 = vadd.f32 %v1751, %v1925
        %v2008 = vadd.f32 %v1752, %v1925
        %v2009 = vadd.f32 %v1753, %v1930
        %v2010 = vadd.f32 %v1754, %v1930
        %v2011 = vadd.f32 %v1755, %v1935
        %v2012 = vadd.f32 %v1756, %v1935
        %v2013 = vadd.f32 %v1757, %v1940
        %v2014 = vadd.f32 %v1758, %v1940
        %v2015 = vadd.f32 %v1759, %v1945
        %v2016 = vadd.f32 %v1760, %v1945
        %v2017 = vadd.f32 %v1761, %v1950
        %v2018 = vadd.f32 %v1762, %v1950
        %v2019 = vadd.f32 %v1763, %v1955
        %v2020 = vadd.f32 %v1764, %v1955
        %v2021 = vmax.f32 %v1957, %v1959
        %v2022 = vrot.slane %v2021, 4
        %v2023 = vmax.f32 %v2021, %v2022
        %v2024 = vrot.slane %v2023, 2
        %v2025 = vmax.f32 %v2023, %v2024
        %v2026 = vrot.slane %v2025, 1
        %v2027 = vmax.f32 %v2025, %v2026
        %v2028 = vmax.f32 %v1958, %v1960
        %v2029 = vrot.slane %v2028, 4
        %v2030 = vmax.f32 %v2028, %v2029
        %v2031 = vrot.slane %v2030, 2
        %v2032 = vmax.f32 %v2030, %v2031
        %v2033 = vrot.slane %v2032, 1
        %v2034 = vmax.f32 %v2032, %v2033
        %v2035 = vmax.f32 %v1961, %v1963
        %v2036 = vrot.slane %v2035, 4
        %v2037 = vmax.f32 %v2035, %v2036
        %v2038 = vrot.slane %v2037, 2
        %v2039 = vmax.f32 %v2037, %v2038
        %v2040 = vrot.slane %v2039, 1
        %v2041 = vmax.f32 %v2039, %v2040
        %v2042 = vmax.f32 %v1962, %v1964
        %v2043 = vrot.slane %v2042, 4
        %v2044 = vmax.f32 %v2042, %v2043
        %v2045 = vrot.slane %v2044, 2
        %v2046 = vmax.f32 %v2044, %v2045
        %v2047 = vrot.slane %v2046, 1
        %v2048 = vmax.f32 %v2046, %v2047
        %v2049 = vmax.f32 %v1965, %v1967
        %v2050 = vrot.slane %v2049, 4
        %v2051 = vmax.f32 %v2049, %v2050
        %v2052 = vrot.slane %v2051, 2
        %v2053 = vmax.f32 %v2051, %v2052
        %v2054 = vrot.slane %v2053, 1
        %v2055 = vmax.f32 %v2053, %v2054
        %v2056 = vmax.f32 %v1966, %v1968
        %v2057 = vrot.slane %v2056, 4
        %v2058 = vmax.f32 %v2056, %v2057
        %v2059 = vrot.slane %v2058, 2
        %v2060 = vmax.f32 %v2058, %v2059
        %v2061 = vrot.slane %v2060, 1
        %v2062 = vmax.f32 %v2060, %v2061
        %v2063 = vmax.f32 %v1969, %v1971
        %v2064 = vrot.slane %v2063, 4
        %v2065 = vmax.f32 %v2063, %v2064
        %v2066 = vrot.slane %v2065, 2
        %v2067 = vmax.f32 %v2065, %v2066
        %v2068 = vrot.slane %v2067, 1
        %v2069 = vmax.f32 %v2067, %v2068
        %v2070 = vmax.f32 %v1970, %v1972
        %v2071 = vrot.slane %v2070, 4
        %v2072 = vmax.f32 %v2070, %v2071
        %v2073 = vrot.slane %v2072, 2
        %v2074 = vmax.f32 %v2072, %v2073
        %v2075 = vrot.slane %v2074, 1
        %v2076 = vmax.f32 %v2074, %v2075
        %v2077 = vmax.f32 %v1973, %v1975
        %v2078 = vrot.slane %v2077, 4
        %v2079 = vmax.f32 %v2077, %v2078
        %v2080 = vrot.slane %v2079, 2
        %v2081 = vmax.f32 %v2079, %v2080
        %v2082 = vrot.slane %v2081, 1
        %v2083 = vmax.f32 %v2081, %v2082
        %v2084 = vmax.f32 %v1974, %v1976
        %v2085 = vrot.slane %v2084, 4
        %v2086 = vmax.f32 %v2084, %v2085
        %v2087 = vrot.slane %v2086, 2
        %v2088 = vmax.f32 %v2086, %v2087
        %v2089 = vrot.slane %v2088, 1
        %v2090 = vmax.f32 %v2088, %v2089
        %v2091 = vmax.f32 %v1977, %v1979
        %v2092 = vrot.slane %v2091, 4
        %v2093 = vmax.f32 %v2091, %v2092
        %v2094 = vrot.slane %v2093, 2
        %v2095 = vmax.f32 %v2093, %v2094
        %v2096 = vrot.slane %v2095, 1
        %v2097 = vmax.f32 %v2095, %v2096
        %v2098 = vmax.f32 %v1978, %v1980
        %v2099 = vrot.slane %v2098, 4
        %v2100 = vmax.f32 %v2098, %v2099
        %v2101 = vrot.slane %v2100, 2
        %v2102 = vmax.f32 %v2100, %v2101
        %v2103 = vrot.slane %v2102, 1
        %v2104 = vmax.f32 %v2102, %v2103
        %v2105 = vmax.f32 %v1981, %v1983
        %v2106 = vrot.slane %v2105, 4
        %v2107 = vmax.f32 %v2105, %v2106
        %v2108 = vrot.slane %v2107, 2
        %v2109 = vmax.f32 %v2107, %v2108
        %v2110 = vrot.slane %v2109, 1
        %v2111 = vmax.f32 %v2109, %v2110
        %v2112 = vmax.f32 %v1982, %v1984
        %v2113 = vrot.slane %v2112, 4
        %v2114 = vmax.f32 %v2112, %v2113
        %v2115 = vrot.slane %v2114, 2
        %v2116 = vmax.f32 %v2114, %v2115
        %v2117 = vrot.slane %v2116, 1
        %v2118 = vmax.f32 %v2116, %v2117
        %v2119 = vmax.f32 %v1985, %v1987
        %v2120 = vrot.slane %v2119, 4
        %v2121 = vmax.f32 %v2119, %v2120
        %v2122 = vrot.slane %v2121, 2
        %v2123 = vmax.f32 %v2121, %v2122
        %v2124 = vrot.slane %v2123, 1
        %v2125 = vmax.f32 %v2123, %v2124
        %v2126 = vmax.f32 %v1986, %v1988
        %v2127 = vrot.slane %v2126, 4
        %v2128 = vmax.f32 %v2126, %v2127
        %v2129 = vrot.slane %v2128, 2
        %v2130 = vmax.f32 %v2128, %v2129
        %v2131 = vrot.slane %v2130, 1
        %v2132 = vmax.f32 %v2130, %v2131
        %v2133 = vmax.f32 %v1989, %v1991
        %v2134 = vrot.slane %v2133, 4
        %v2135 = vmax.f32 %v2133, %v2134
        %v2136 = vrot.slane %v2135, 2
        %v2137 = vmax.f32 %v2135, %v2136
        %v2138 = vrot.slane %v2137, 1
        %v2139 = vmax.f32 %v2137, %v2138
        %v2140 = vmax.f32 %v1990, %v1992
        %v2141 = vrot.slane %v2140, 4
        %v2142 = vmax.f32 %v2140, %v2141
        %v2143 = vrot.slane %v2142, 2
        %v2144 = vmax.f32 %v2142, %v2143
        %v2145 = vrot.slane %v2144, 1
        %v2146 = vmax.f32 %v2144, %v2145
        %v2147 = vmax.f32 %v1993, %v1995
        %v2148 = vrot.slane %v2147, 4
        %v2149 = vmax.f32 %v2147, %v2148
        %v2150 = vrot.slane %v2149, 2
        %v2151 = vmax.f32 %v2149, %v2150
        %v2152 = vrot.slane %v2151, 1
        %v2153 = vmax.f32 %v2151, %v2152
        %v2154 = vmax.f32 %v1994, %v1996
        %v2155 = vrot.slane %v2154, 4
        %v2156 = vmax.f32 %v2154, %v2155
        %v2157 = vrot.slane %v2156, 2
        %v2158 = vmax.f32 %v2156, %v2157
        %v2159 = vrot.slane %v2158, 1
        %v2160 = vmax.f32 %v2158, %v2159
        %v2161 = vmax.f32 %v1997, %v1999
        %v2162 = vrot.slane %v2161, 4
        %v2163 = vmax.f32 %v2161, %v2162
        %v2164 = vrot.slane %v2163, 2
        %v2165 = vmax.f32 %v2163, %v2164
        %v2166 = vrot.slane %v2165, 1
        %v2167 = vmax.f32 %v2165, %v2166
        %v2168 = vmax.f32 %v1998, %v2000
        %v2169 = vrot.slane %v2168, 4
        %v2170 = vmax.f32 %v2168, %v2169
        %v2171 = vrot.slane %v2170, 2
        %v2172 = vmax.f32 %v2170, %v2171
        %v2173 = vrot.slane %v2172, 1
        %v2174 = vmax.f32 %v2172, %v2173
        %v2175 = vmax.f32 %v2001, %v2003
        %v2176 = vrot.slane %v2175, 4
        %v2177 = vmax.f32 %v2175, %v2176
        %v2178 = vrot.slane %v2177, 2
        %v2179 = vmax.f32 %v2177, %v2178
        %v2180 = vrot.slane %v2179, 1
        %v2181 = vmax.f32 %v2179, %v2180
        %v2182 = vmax.f32 %v2002, %v2004
        %v2183 = vrot.slane %v2182, 4
        %v2184 = vmax.f32 %v2182, %v2183
        %v2185 = vrot.slane %v2184, 2
        %v2186 = vmax.f32 %v2184, %v2185
        %v2187 = vrot.slane %v2186, 1
        %v2188 = vmax.f32 %v2186, %v2187
        %v2189 = vmax.f32 %v2005, %v2007
        %v2190 = vrot.slane %v2189, 4
        %v2191 = vmax.f32 %v2189, %v2190
        %v2192 = vrot.slane %v2191, 2
        %v2193 = vmax.f32 %v2191, %v2192
        %v2194 = vrot.slane %v2193, 1
        %v2195 = vmax.f32 %v2193, %v2194
        %v2196 = vmax.f32 %v2006, %v2008
        %v2197 = vrot.slane %v2196, 4
        %v2198 = vmax.f32 %v2196, %v2197
        %v2199 = vrot.slane %v2198, 2
        %v2200 = vmax.f32 %v2198, %v2199
        %v2201 = vrot.slane %v2200, 1
        %v2202 = vmax.f32 %v2200, %v2201
        %v2203 = vmax.f32 %v2009, %v2011
        %v2204 = vrot.slane %v2203, 4
        %v2205 = vmax.f32 %v2203, %v2204
        %v2206 = vrot.slane %v2205, 2
        %v2207 = vmax.f32 %v2205, %v2206
        %v2208 = vrot.slane %v2207, 1
        %v2209 = vmax.f32 %v2207, %v2208
        %v2210 = vmax.f32 %v2010, %v2012
        %v2211 = vrot.slane %v2210, 4
        %v2212 = vmax.f32 %v2210, %v2211
        %v2213 = vrot.slane %v2212, 2
        %v2214 = vmax.f32 %v2212, %v2213
        %v2215 = vrot.slane %v2214, 1
        %v2216 = vmax.f32 %v2214, %v2215
        %v2217 = vmax.f32 %v2013, %v2015
        %v2218 = vrot.slane %v2217, 4
        %v2219 = vmax.f32 %v2217, %v2218
        %v2220 = vrot.slane %v2219, 2
        %v2221 = vmax.f32 %v2219, %v2220
        %v2222 = vrot.slane %v2221, 1
        %v2223 = vmax.f32 %v2221, %v2222
        %v2224 = vmax.f32 %v2014, %v2016
        %v2225 = vrot.slane %v2224, 4
        %v2226 = vmax.f32 %v2224, %v2225
        %v2227 = vrot.slane %v2226, 2
        %v2228 = vmax.f32 %v2226, %v2227
        %v2229 = vrot.slane %v2228, 1
        %v2230 = vmax.f32 %v2228, %v2229
        %v2231 = vmax.f32 %v2017, %v2019
        %v2232 = vrot.slane %v2231, 4
        %v2233 = vmax.f32 %v2231, %v2232
        %v2234 = vrot.slane %v2233, 2
        %v2235 = vmax.f32 %v2233, %v2234
        %v2236 = vrot.slane %v2235, 1
        %v2237 = vmax.f32 %v2235, %v2236
        %v2238 = vmax.f32 %v2018, %v2020
        %v2239 = vrot.slane %v2238, 4
        %v2240 = vmax.f32 %v2238, %v2239
        %v2241 = vrot.slane %v2240, 2
        %v2242 = vmax.f32 %v2240, %v2241
        %v2243 = vrot.slane %v2242, 1
        %v2244 = vmax.f32 %v2242, %v2243
        %v2245 = vlaneseq
        %v2246 = vand.u32 %v2245, 127
        %v2247 = vadd.s32 %v2246, 128
        %vm2248 = vcmp.lt.s32.totalorder %v2246, 128
        %vm2249 = vcmp.lt.s32.totalorder %v2247, 128
        %vm2266 = vcmask 1041409
        %v2267 = vsel %vm2266, %v2041, %v2027
        %vm2268 = vcmask 1042434
        %v2269 = vsel %vm2268, %v2055, %v2267
        %vm2270 = vcmask 1043459
        %v2271 = vsel %vm2270, %v2069, %v2269
        %vm2272 = vcmask 1044484
        %v2273 = vsel %vm2272, %v2083, %v2271
        %vm2274 = vcmask 1045509
        %v2275 = vsel %vm2274, %v2097, %v2273
        %vm2276 = vcmask 1046534
        %v2277 = vsel %vm2276, %v2111, %v2275
        %vm2278 = vcmask 1047559
        %v2279 = vsel %vm2278, %v2125, %v2277
        %v2280 = vsel %vm2266, %v2048, %v2034
        %v2281 = vsel %vm2268, %v2062, %v2280
        %v2282 = vsel %vm2270, %v2076, %v2281
        %v2283 = vsel %vm2272, %v2090, %v2282
        %v2284 = vsel %vm2274, %v2104, %v2283
        %v2285 = vsel %vm2276, %v2118, %v2284
        %v2286 = vsel %vm2278, %v2132, %v2285
        %v2305 = vsel %vm2266, %v2153, %v2139
        %v2306 = vsel %vm2268, %v2167, %v2305
        %v2307 = vsel %vm2270, %v2181, %v2306
        %v2308 = vsel %vm2272, %v2195, %v2307
        %v2309 = vsel %vm2274, %v2209, %v2308
        %v2310 = vsel %vm2276, %v2223, %v2309
        %v2311 = vsel %vm2278, %v2237, %v2310
        %v2312 = vsel %vm2266, %v2160, %v2146
        %v2313 = vsel %vm2268, %v2174, %v2312
        %v2314 = vsel %vm2270, %v2188, %v2313
        %v2315 = vsel %vm2272, %v2202, %v2314
        %v2316 = vsel %vm2274, %v2216, %v2315
        %v2317 = vsel %vm2276, %v2230, %v2316
        %v2318 = vsel %vm2278, %v2244, %v2317
        %v2321 = vsel %vm2248, %v2279, %v2311
        %v2322 = vsel %vm2249, %v2286, %v2318
        %v2323 = vpack.c.bf16 %v2321, %v2321
        %v2324 = vpack.c.bf16 %v2322, %v2322
        %v2325 = vld [vmem:[#allocation7] sm:$0xf]
        %v2326 = vld [vmem:[#allocation7 + $0x4] sm:$0xf]
        %v2327 = vld [vmem:[#allocation7 + $0x8] sm:$0xf]
        %v2328 = vld [vmem:[#allocation7 + $0xc] sm:$0xf]
        %v2329 = vld [vmem:[#allocation7 + $0x10] sm:$0xf]
        %v2330 = vld [vmem:[#allocation7 + $0x14] sm:$0xf]
        %v2331 = vld [vmem:[#allocation7 + $0x18] sm:$0xf]
        %v2332 = vld [vmem:[#allocation7 + $0x1c] sm:$0xf]
        %v2333 = vld [vmem:[#allocation7 + $0x20] sm:$0xf]
        %v2334 = vld [vmem:[#allocation7 + $0x24] sm:$0xf]
        %v2335 = vld [vmem:[#allocation7 + $0x28] sm:$0xf]
        %v2336 = vld [vmem:[#allocation7 + $0x2c] sm:$0xf]
        %v2337 = vld [vmem:[#allocation7 + $0x30] sm:$0xf]
        %v2338 = vld [vmem:[#allocation7 + $0x34] sm:$0xf]
        %v2339 = vld [vmem:[#allocation7 + $0x38] sm:$0xf]
        %v2340 = vld [vmem:[#allocation7 + $0x3c] sm:$0xf]
        %v2341 = vld [vmem:[#allocation7 + $0x40] sm:$0xf]
        %v2342 = vld [vmem:[#allocation7 + $0x44] sm:$0xf]
        %v2343 = vld [vmem:[#allocation7 + $0x48] sm:$0xf]
        %v2344 = vld [vmem:[#allocation7 + $0x4c] sm:$0xf]
        %v2345 = vld [vmem:[#allocation7 + $0x50] sm:$0xf]
        %v2346 = vld [vmem:[#allocation7 + $0x54] sm:$0xf]
        %v2347 = vld [vmem:[#allocation7 + $0x58] sm:$0xf]
        %v2348 = vld [vmem:[#allocation7 + $0x5c] sm:$0xf]
        %v2349 = vld [vmem:[#allocation7 + $0x60] sm:$0xf]
        %v2350 = vld [vmem:[#allocation7 + $0x64] sm:$0xf]
        %v2351 = vld [vmem:[#allocation7 + $0x68] sm:$0xf]
        %v2352 = vld [vmem:[#allocation7 + $0x6c] sm:$0xf]
        %v2353 = vld [vmem:[#allocation7 + $0x70] sm:$0xf]
        %v2354 = vld [vmem:[#allocation7 + $0x74] sm:$0xf]
        %v2355 = vld [vmem:[#allocation7 + $0x78] sm:$0xf]
        %v2356 = vld [vmem:[#allocation7 + $0x7c] sm:$0xf]
        %v2357 = vld [vmem:[%s7] sm:$0x1]
        %v2359 = vlaneseq
        %v2360 = vshrl.u32 %v2359, 7
        %v2361 = vsub.s32 0, %v2360
        %v2362 = vrot.slane %v2357, %v2361
        %v2396 = vunpack.c.l.b16 %v2325
        %v2397 = vunpack.c.l.b16 %v2326
        %v2398 = vunpack.c.l.b16 %v2327
        %v2399 = vunpack.c.l.b16 %v2328
        %v2400 = vunpack.c.l.b16 %v2329
        %v2401 = vunpack.c.l.b16 %v2330
        %v2402 = vunpack.c.l.b16 %v2331
        %v2403 = vunpack.c.l.b16 %v2332
        %v2404 = vunpack.c.l.b16 %v2333
        %v2405 = vunpack.c.l.b16 %v2334
        %v2406 = vunpack.c.l.b16 %v2335
        %v2407 = vunpack.c.l.b16 %v2336
        %v2408 = vunpack.c.l.b16 %v2337
        %v2409 = vunpack.c.l.b16 %v2338
        %v2410 = vunpack.c.l.b16 %v2339
        %v2411 = vunpack.c.l.b16 %v2340
        %v2412 = vunpack.c.l.b16 %v2341
        %v2413 = vunpack.c.l.b16 %v2342
        %v2414 = vunpack.c.l.b16 %v2343
        %v2415 = vunpack.c.l.b16 %v2344
        %v2416 = vunpack.c.l.b16 %v2345
        %v2417 = vunpack.c.l.b16 %v2346
        %v2418 = vunpack.c.l.b16 %v2347
        %v2419 = vunpack.c.l.b16 %v2348
        %v2420 = vunpack.c.l.b16 %v2349
        %v2421 = vunpack.c.l.b16 %v2350
        %v2422 = vunpack.c.l.b16 %v2351
        %v2423 = vunpack.c.l.b16 %v2352
        %v2424 = vunpack.c.l.b16 %v2353
        %v2425 = vunpack.c.l.b16 %v2354
        %v2426 = vunpack.c.l.b16 %v2355
        %v2427 = vunpack.c.l.b16 %v2356
        %v2428 = vpack.c.b16 %v2397, %v2396
        %v2429 = vpack.c.b16 %v2399, %v2398
        %v2430 = vpack.c.b16 %v2401, %v2400
        %v2431 = vpack.c.b16 %v2403, %v2402
        %v2432 = vpack.c.b16 %v2405, %v2404
        %v2433 = vpack.c.b16 %v2407, %v2406
        %v2434 = vpack.c.b16 %v2409, %v2408
        %v2435 = vpack.c.b16 %v2411, %v2410
        %v2436 = vpack.c.b16 %v2413, %v2412
        %v2437 = vpack.c.b16 %v2415, %v2414
        %v2438 = vpack.c.b16 %v2417, %v2416
        %v2439 = vpack.c.b16 %v2419, %v2418
        %v2440 = vpack.c.b16 %v2421, %v2420
        %v2441 = vpack.c.b16 %v2423, %v2422
        %v2442 = vpack.c.b16 %v2425, %v2424
        %v2443 = vpack.c.b16 %v2427, %v2426
        %2460 = vmatprep.subr.bf16.mxu0 0
        %2461 = vmatpush1.bf16.msra.mxu0 %v2428
        %2462 = vmatprep.subr.bf16.mxu0 0
        %2463 = vmatpush1.bf16.msra.mxu0 %v2429
        %2464 = vmatprep.subr.bf16.mxu0 0
        %2465 = vmatpush1.bf16.msra.mxu0 %v2430
        %2466 = vmatprep.subr.bf16.mxu0 0
        %2467 = vmatpush1.bf16.msra.mxu0 %v2431
        %2468 = vmatprep.subr.bf16.mxu0 0
        %2469 = vmatpush1.bf16.msra.mxu0 %v2432
        %2470 = vmatprep.subr.bf16.mxu0 0
        %2471 = vmatpush1.bf16.msra.mxu0 %v2433
        %2472 = vmatprep.subr.bf16.mxu0 0
        %2473 = vmatpush1.bf16.msra.mxu0 %v2434
        %2474 = vmatprep.subr.bf16.mxu0 0
        %2475 = vmatpush1.bf16.msra.mxu0 %v2435
        %2476 = vmatprep.subr.bf16.mxu0 0
        %2477 = vmatpush1.bf16.msra.mxu0 %v2436
        %2478 = vmatprep.subr.bf16.mxu0 0
        %2479 = vmatpush1.bf16.msra.mxu0 %v2437
        %2480 = vmatprep.subr.bf16.mxu0 0
        %2481 = vmatpush1.bf16.msra.mxu0 %v2438
        %2482 = vmatprep.subr.bf16.mxu0 0
        %2483 = vmatpush1.bf16.msra.mxu0 %v2439
        %2484 = vmatprep.subr.bf16.mxu0 0
        %2485 = vmatpush1.bf16.msra.mxu0 %v2440
        %2486 = vmatprep.subr.bf16.mxu0 0
        %2487 = vmatpush1.bf16.msra.mxu0 %v2441
        %2488 = vmatprep.subr.bf16.mxu0 0
        %2489 = vmatpush1.bf16.msra.mxu0 %v2442
        %2490 = vmatprep.subr.bf16.mxu0 0
        %2491 = vmatpush1.bf16.msra.mxu0 %v2443
        %2492 = vmatprep.mubr.bf16.mxu0 %v2324
        %2493 = vmatmul.mubr.bf16.gmra.mrb[0].mxu0 %v2323
        %v2494 = vpop.f32.mrb[0].mxu0
        %v2495 = vadd.f32 %v2362, %v2494
        %v2496 = vpop.f32.mrb[0].mxu0
        %v2497 = vpop.f32.mrb[0].mxu0
        %v2498 = vpop.f32.mrb[0].mxu0
        %2499 = vdwg.mxu0
        %vm2500 = vcmp.gt.f32.partialorder %v2495, 0.0
        %v2501 = vmul.f32 %v2495, 0.01
        %v2502 = vsel %vm2500, %v2495, %v2501
        %2503 = vmax.xlane.f32.xlu0 %v2502
        %v2504 = vpop.xlane.xlu0 %2503
        %v2505 = vsub.f32 %v2502, %v2504
        %v2506 = vmul.f32 %v2505, 1.442695
        %v2507 = vpow.pop %v2506
        %2508 = vadd.xlane.f32.xlu0 %v2507
        %v2509 = vpop.xlane.xlu0 %2508
        %v2510 = vrcp.pop %v2509
        %v2511 = vmul.f32 %v2507, %v2510
        %2512 = vst [vmem:[%s382] sm:$0xff] %v2511
        %s2513 = sand.u32 %s217, 1
        %s2514 = scalar_lea.sflag [#allocation4], %s2513
        %s2515 = sand.u32 %s217, 1
        %s2516 = smul.addr %s2515, 8
        %s2517 = scalar_lea.vmem [#allocation8], %s2516
        // Predicated region
        $region65: #{tpu_custom_call.1} parent=51 // pred_check
          %p2518 = pneg %p227
        $region66: #{tpu_custom_call.1} parent=51 // pred_check_branch
          %2520 = sbr.rel (%p2518) target = $region68
        $region67: #{tpu_custom_call.1} parent=51 // pred_region
          %s2522 = ssub.s32 128, 128
          %2523 = vsyncadd %s2514, %s2522
          %s2524 = smul.addr %s26, 128
          %s2525 = scalar_lea.hbm %s8, %s2524
          %s2527 = sshll.u32 %s2517, 4
          %s2528 = int_to_ptr.vmem [resolvable:$true] %s2527
          %2530 = dma.vmem_to_hbm [thread:$0]  %s2528, 128, %s2525, %s2514
        $region68: #{tpu_custom_call.1} parent=51 // pred_fallthru
          _
      $region52: #{tpu_custom_call.1} parent=5 // pred_fallthru
        _
      %p2531 = scmp.le.s32.totalorder 2, %s21
      // Predicated region
      $region69: #{tpu_custom_call.1} parent=5 // pred_check
        %p2532 = pneg %p2531
      $region70: #{tpu_custom_call.1} parent=5 // pred_check_branch
        %2534 = sbr.rel (%p2532) target = $region72
      $region71: #{tpu_custom_call.1} parent=5 // pred_region
        %s2535 = ssub.s32 %s21, 2
        // Predicated region
        $region73: #{tpu_custom_call.1} parent=71 // pred_check
          %p2536 = pneg %p233
        $region74: #{tpu_custom_call.1} parent=71 // pred_check_branch
          %2538 = sbr.rel (%p2536) target = $region76
        $region75: #{tpu_custom_call.1} parent=71 // pred_region
          %s2539 = sand.u32 %s218, 1
          %s2540 = scalar_lea.sflag [#allocation4], %s2539
          %s2541 = sand.u32 %s218, 1
          %s2542 = smul.addr %s2541, 8
          %s2543 = scalar_lea.vmem [#allocation8], %s2542
          %2544 = dma.done %s2540, 128
        $region76: #{tpu_custom_call.1} parent=71 // pred_fallthru
          _
      $region72: #{tpu_custom_call.1} parent=5 // pred_fallthru
        _
    $region6: #{tpu_custom_call.1} parent=1 // loop_footer
      %s25 = sadd.s32 1, %s21
    $region7: #{tpu_custom_call.1} parent=1 // loop_footer_branch
      %20 = sbr.rel target = $region3
    $region8: #{tpu_custom_call.1} parent=1 // loop_exit
      _
    %2545 = vsyncpa [#allocation3], 1
    %s2546 = scalar_lea.sflag [#allocation3], 1
    %2547 = vsyncpa %s2546, 1
    %2548 = vsyncpa [#allocation6], 1
    %2549 = vsyncpa [#allocation4], 1
    %s2550 = scalar_lea.sflag [#allocation4], 1
    %2551 = vsyncpa %s2550, 1

</llo_original>
